<compile_context>
chip_gen: v5e
topology: v5e:2x2
jax: 0.10.0
libtpu: 0.0.40
codegen_flags: <defaults>
</compile_context>

<pallas_src>
import numpy as np
import jax
import jax.numpy as jnp
from jax.experimental import pallas as pl
from jax.experimental.pallas import tpu as pltpu


# ------------------------------ helpers / safety ------------------------------

def _pad8(n):
    return ((n + 7) // 8) * 8


def _check_no_wrap(H, W):
    """Prove every lane-roll read feeding a *needed* (valid) output stays inside its
    own image on the flat H*W lane grid, so roll wrap-around (and, with batch folding,
    the neighbouring image's lanes) can never corrupt a valid output."""
    S = H * W
    H1, W1 = H - 4, W - 4
    H2, W2 = H1 // 2 - 4, W1 // 2 - 4
    assert H1 > 0 and W1 > 0 and H2 > 0 and W2 > 0, "input spatially too small"
    conv4_need = 2 * (H2 - 1) * W + 2 * (W2 - 1)        # positions attn2 reads from conv4
    conv3_need = conv4_need + 2 * (2 * W + 2)           # + conv4's max (dil=2) read offset
    pool_need = conv3_need + 2 * (2 * W + 2)            # + conv3's max (dil=2) read offset
    conv2_need = max((H1 - 1) * W + (W1 - 1),           # attn1 reads all of conv2's valid region
                     pool_need + (W + 1))               # + pooling window offset
    conv1_need = conv2_need + (2 * W + 2)               # + conv2's max read offset
    input_need = conv1_need + (2 * W + 2)               # + conv1's max read offset
    assert input_need < S, (
        f"rolled reads would wrap past the image boundary ({input_need} >= {S})")


def _default_batch_chunk(B):
    # v7x has 2 TensorCores per chip: keep grid=(B,) ("parallel") so both stay busy.
    # Single-TC v5e/v6e: fold pairs of batch items onto lanes to halve grid steps.
    try:
        kind = jax.devices()[0].device_kind.lower()
    except Exception:
        kind = ""
    if "v7" in kind or "7x" in kind:
        return 1
    return 2 if B % 2 == 0 else 1


# ------------------------------ fused Pallas kernel ------------------------------

def _build_fused_kernel(H, W, chunk):
    """Fused forward kernel; `chunk` batch items share one grid step on the lane axis.

    Layout: channels (zero-padded to 8) on sublanes, flattened spatial (times chunk)
    on lanes; the 'valid' region shrinks layer by layer and pooled values live at even
    (row, col) positions, making conv3/conv4 2-dilated convs on the same grid."""
    S = H * W
    L = chunk * S
    H1, W1 = H - 4, W - 4
    H2, W2 = H1 // 2 - 4, W1 // 2 - 4
    half_hw1 = 0.5 * float(H1 * W1)
    half_hw2 = 0.5 * float(H2 * W2)

    def shift(a, d):
        # y[:, p] = a[:, p + d]; wrap / cross-image reads only ever feed positions
        # outside the shrinking valid region (proved by _check_no_wrap).
        return a if d == 0 else pltpu.roll(a, L - d, axis=1)

    def conv3x3(a, w_ref, b_ref, dil):
        # 3x3 'valid' conv (dilation `dil` on the storage grid) + folded-BN bias + ReLU.
        # im2col: 4 lane-rolls + 2 aligned sublane concats build a (9*Cin, L) stack so
        # the whole conv is ONE bf16 MXU matmul (K = 72) instead of 9 tiny matmuls.
        d = dil
        c1 = shift(a, d)
        c2 = shift(c1, d)
        row0 = jnp.concatenate([a, c1, c2], axis=0)            # (3*Cin, L)
        row1 = shift(row0, d * W)
        row2 = shift(row1, d * W)
        stack = jnp.concatenate([row0, row1, row2], axis=0)    # (9*Cin, L)
        acc = jnp.dot(w_ref[...], stack.astype(jnp.bfloat16),
                      preferred_element_type=jnp.float32)      # (Cout, L) f32
        return jnp.maximum(acc + b_ref[...], 0.0)

    def attention(a, w_ref, b_ref, valid, half_hw):
        # 1x1 conv as VPU broadcast-mul + sublane reduce (no M=1 MXU matmul), sigmoid,
        # then per-image normalisation: mask * H*W / (2 * ||mask||_1) over valid lanes.
        logits = jnp.sum(a * w_ref[...], axis=0, keepdims=True) + b_ref[...]   # (1, L)
        m = jax.nn.sigmoid(logits) * valid                     # 0 outside the valid region
        segs = []
        for g in range(chunk):                                 # per-image lane segment
            seg = m[:, g * S:(g + 1) * S]
            inv = pl.reciprocal(jnp.sum(seg, axis=1, keepdims=True), approx=True)
            segs.append(seg * (half_hw * inv))
        return segs[0] if chunk == 1 else jnp.concatenate(segs, axis=1)

    def kernel(x_ref, v1_ref, v2_ref,
               w1_ref, b1_ref, w2_ref, b2_ref, w3_ref, b3_ref, w4_ref, b4_ref,
               aw1_ref, ab1_ref, aw2_ref, ab2_ref,
               m1_ref, m2_ref):
        x = x_ref[0]                                           # (8, L)
        a1 = conv3x3(x, w1_ref, b1_ref, dil=1)                 # valid (H-2, W-2)
        a2 = conv3x3(a1, w2_ref, b2_ref, dil=1)                # valid (H1, W1)
        m1_ref[0] = attention(a2, aw1_ref, ab1_ref, v1_ref[...], half_hw1)
        # AvgPool2d(2x2): 2 rolls + adds; the 1/4 factor is folded into conv3's weights.
        # Pooled values live at even (row, col) positions -> conv3/conv4 are 2-dilated.
        # Dropout2d(p=0.25) is identity at inference.
        p = a2 + shift(a2, 1)
        p = p + shift(p, W)
        a3 = conv3x3(p, w3_ref, b3_ref, dil=2)                 # valid (H1//2-2, W1//2-2)
        a4 = conv3x3(a3, w4_ref, b4_ref, dil=2)                # valid (H2, W2)
        m2_ref[0] = attention(a4, aw2_ref, ab2_ref, v2_ref[...], half_hw2)

    return kernel


# --------------------------------- model forward ---------------------------------

def appearance_model_mtts_forward(x_nchw, params, batch_chunk=None):
    """AppearanceModel_MTTS.forward (eca=False, inference). x: NCHW float32.

    batch_chunk: batch items folded onto one grid step's lane axis.
      None -> auto (1 on dual-TC v7x, 2 on single-TC v5e/v6e)."""
    B, Ci, H, W = x_nchw.shape
    S = H * W
    H1, W1 = H - 4, W - 4
    H2, W2 = H1 // 2 - 4, W1 // 2 - 4
    _check_no_wrap(H, W)

    chunk = _default_batch_chunk(B) if batch_chunk is None else batch_chunk
    if B % chunk != 0:
        raise ValueError(f"batch_chunk={chunk} must divide batch={B}")
    L = chunk * S

    # Validity masks on the flat HxW storage grid, tiled per folded batch item.
    rows = np.arange(S, dtype=np.int32) // W
    cols = np.arange(S, dtype=np.int32) % W
    v1 = ((rows < H1) & (cols < W1)).astype(np.float32)[None, :]
    v2 = ((rows < 2 * H2) & (cols < 2 * W2)
          & (rows % 2 == 0) & (cols % 2 == 0)).astype(np.float32)[None, :]
    v1 = jnp.asarray(np.tile(v1, (1, chunk)))                       # (1, L)
    v2 = jnp.asarray(np.tile(v2, (1, chunk)))                       # (1, L)

    def fold_conv(p, extra=1.0):
        # (KH, KW, Cin, Cout) HWIO -> (Cout_pad8, 9*Cin_pad8) bf16, BN scale folded in,
        # zero-padded channels so every activation / weight tile is sublane-aligned.
        w = p["w"]
        KH, KW, ci, co = w.shape
        cip, cop = _pad8(ci), _pad8(co)
        wf = jnp.transpose(w, (3, 0, 1, 2)) * (p["scale"][:, None, None, None] * extra)
        wf = jnp.pad(wf, ((0, cop - co), (0, 0), (0, 0), (0, cip - ci)))
        wf = wf.reshape(cop, KH * KW * cip)
        bias = jnp.pad(p["bias"], (0, cop - co)).reshape(cop, 1)
        return wf.astype(jnp.bfloat16), bias

    w1, b1 = fold_conv(params["conv1"])
    w2, b2 = fold_conv(params["conv2"])
    w3, b3 = fold_conv(params["conv3"], extra=0.25)   # AvgPool 1/4 folded into conv3
    w4, b4 = fold_conv(params["conv4"])

    c2out = params["conv2"]["w"].shape[-1]
    c4out = params["conv4"]["w"].shape[-1]
    aw1 = jnp.pad(params["attn1_w"], ((0, _pad8(c2out) - c2out), (0, 0)))   # (8, 1)
    ab1 = params["attn1_b"].reshape(1, 1)
    aw2 = jnp.pad(params["attn2_w"], ((0, _pad8(c4out) - c4out), (0, 0)))   # (8, 1)
    ab2 = params["attn2_b"].reshape(1, 1)

    # NCHW -> (B//chunk, 8, chunk*S): zero-pad channels, fold `chunk` images onto lanes.
    cin_p = _pad8(Ci)
    x_pad = jnp.pad(x_nchw.reshape(B, Ci, S), ((0, 0), (0, cin_p - Ci), (0, 0)))
    xf = (x_pad.reshape(B // chunk, chunk, cin_p, S)
          .transpose(0, 2, 1, 3)
          .reshape(B // chunk, cin_p, L))

    def whole(a):                                     # grid-invariant weight/mask blocks
        n = a.ndim
        return pl.BlockSpec(a.shape, lambda b, n=n: (0,) * n)

    m1f, m2f = pl.pallas_call(
        _build_fused_kernel(H, W, chunk),
        out_shape=(jax.ShapeDtypeStruct((B // chunk, 1, L), jnp.float32),
                   jax.ShapeDtypeStruct((B // chunk, 1, L), jnp.float32)),
        grid=(B // chunk,),
        in_specs=[
            pl.BlockSpec((1, cin_p, L), lambda b: (b, 0, 0)),   # x
            whole(v1), whole(v2),
            whole(w1), whole(b1), whole(w2), whole(b2),
            whole(w3), whole(b3), whole(w4), whole(b4),
            whole(aw1), whole(ab1), whole(aw2), whole(ab2),
        ],
        out_specs=[pl.BlockSpec((1, 1, L), lambda b: (b, 0, 0)),
                   pl.BlockSpec((1, 1, L), lambda b: (b, 0, 0))],
        compiler_params=pltpu.CompilerParams(dimension_semantics=("parallel",)),
    )(xf, v1, v2, w1, b1, w2, b2, w3, b3, w4, b4, aw1, ab1, aw2, ab2)

    # Cheap JAX-side extraction of the valid regions from the lane-dense outputs.
    M1 = m1f.reshape(B, H, W)[:, :H1, :W1][:, None]                      # (B, 1, H-4, W-4)
    M2 = m2f.reshape(B, H, W)[:, 0:2 * H2:2, 0:2 * W2:2][:, None]        # (B, 1, H2, W2)
    return M1, M2


# ------------------------------ deterministic params ------------------------------

def init_params(key, in_planes=4, ksize=3):
    C = in_planes

    def conv_bn(k, cin, cout):
        k1, k2, k3, k4, k5, k6 = jax.random.split(k, 6)
        w = 0.1 * jax.random.normal(k1, (ksize, ksize, cin, cout), jnp.float32)   # HWIO
        conv_b = 0.05 * jax.random.normal(k2, (cout,), jnp.float32)
        gamma = 1.0 + 0.1 * jax.random.normal(k3, (cout,), jnp.float32)
        beta = 0.05 * jax.random.normal(k4, (cout,), jnp.float32)
        rmean = 0.1 * jax.random.normal(k5, (cout,), jnp.float32)
        rvar = 1.0 + 0.1 * jax.random.uniform(k6, (cout,), jnp.float32)
        eps = 1e-5
        scale = gamma / jnp.sqrt(rvar + eps)           # folded BN scale
        bias = (conv_b - rmean) * scale + beta         # folded BN bias
        return dict(w=w, scale=scale, bias=bias)

    ks = jax.random.split(key, 8)
    return {
        "conv1": conv_bn(ks[0], 3, C),
        "conv2": conv_bn(ks[1], C, C),
        "conv3": conv_bn(ks[2], C, 2 * C),
        "conv4": conv_bn(ks[3], 2 * C, 2 * C),
        "attn1_w": 0.2 * jax.random.normal(ks[4], (C, 1), jnp.float32),
        "attn1_b": 0.05 * jax.random.normal(ks[5], (1,), jnp.float32),
        "attn2_w": 0.2 * jax.random.normal(ks[6], (2 * C, 1), jnp.float32),
        "attn2_b": 0.05 * jax.random.normal(ks[7], (1,), jnp.float32),
    }


# ------------------------------ pure-JAX reference ------------------------------

def reference_forward(x_nchw, params):
    x = jnp.transpose(x_nchw, (0, 2, 3, 1))

    def conv_bn_relu(xx, p):
        y = jax.lax.conv_general_dilated(xx, p["w"], (1, 1), "VALID",
                                         dimension_numbers=("NHWC", "HWIO", "NHWC"))
        return jax.nn.relu(y * p["scale"] + p["bias"])

    def attn(xx, w, b):
        logits = jnp.einsum("bhwc,co->bhwo", xx, w) + b
        mask = jax.nn.sigmoid(logits)
        H, W = xx.shape[1], xx.shape[2]
        norm = 2.0 * jnp.sum(mask, axis=(1, 2, 3), keepdims=True)
        return mask * (H * W) / norm

    def pool(xx):
        B, H, W, C = xx.shape
        return xx.reshape(B, H // 2, 2, W // 2, 2, C).mean(axis=(2, 4))

    A1 = conv_bn_relu(x, params["conv1"])
    A2 = conv_bn_relu(A1, params["conv2"])
    M1 = attn(A2, params["attn1_w"], params["attn1_b"])
    A3 = conv_bn_relu(pool(A2), params["conv3"])
    A4 = conv_bn_relu(A3, params["conv4"])
    M2 = attn(A4, params["attn2_w"], params["attn2_b"])
    return jnp.transpose(M1, (0, 3, 1, 2)), jnp.transpose(M2, (0, 3, 1, 2))


# ----------------------------------- main -----------------------------------

if __name__ == "__main__":
    key = jax.random.PRNGKey(0)
    kp, kx = jax.random.split(key)
    params = init_params(kp, in_planes=4)
    x = jax.random.normal(kx, (2, 3, 16, 16), jnp.float32)   # NCHW, matches PyTorch input

    fwd = jax.jit(appearance_model_mtts_forward, static_argnames=("batch_chunk",))
    M1r, M2r = reference_forward(x, params)

    # Auto layout: grid=(B,)/"parallel" on dual-TC v7x, batch-pairs-on-lanes on v5e/v6e.
    M1, M2 = fwd(x, params)
    jax.block_until_ready((M1, M2))

    # Validate both layouts (v7x-preferred chunk=1 and v5e/v6e-preferred chunk=2).
    for chunk in (1, 2):
        M1, M2 = fwd(x, params, batch_chunk=chunk)
        jax.block_until_ready((M1, M2))
        assert M1.shape == (2, 1, 12, 12), (chunk, M1.shape)
        assert M2.shape == (2, 1, 2, 2), (chunk, M2.shape)
        assert jnp.allclose(M1, M1r, rtol=5e-2, atol=5e-2), \
            (chunk, float(jnp.max(jnp.abs(M1 - M1r))))
        assert jnp.allclose(M2, M2r, rtol=5e-2, atol=5e-2), \
            (chunk, float(jnp.max(jnp.abs(M2 - M2r))))

    print("KERNEL_OK")
</pallas_src>

<mosaic_0001>
module attributes {stable_mosaic.version = 11 : i64} {
  func.func @kernel(%arg0: i32, %arg1: memref<1x8x512xf32, #tpu.memory_space<vmem>>, %arg2: memref<1x512xf32, #tpu.memory_space<vmem>>, %arg3: memref<1x512xf32, #tpu.memory_space<vmem>>, %arg4: memref<8x72xbf16, #tpu.memory_space<vmem>>, %arg5: memref<8x1xf32, #tpu.memory_space<vmem>>, %arg6: memref<8x72xbf16, #tpu.memory_space<vmem>>, %arg7: memref<8x1xf32, #tpu.memory_space<vmem>>, %arg8: memref<8x72xbf16, #tpu.memory_space<vmem>>, %arg9: memref<8x1xf32, #tpu.memory_space<vmem>>, %arg10: memref<8x72xbf16, #tpu.memory_space<vmem>>, %arg11: memref<8x1xf32, #tpu.memory_space<vmem>>, %arg12: memref<8x1xf32, #tpu.memory_space<vmem>>, %arg13: memref<1x1xf32, #tpu.memory_space<vmem>>, %arg14: memref<8x1xf32, #tpu.memory_space<vmem>>, %arg15: memref<1x1xf32, #tpu.memory_space<vmem>>, %arg16: memref<1x1x512xf32, #tpu.memory_space<vmem>>, %arg17: memref<1x1x512xf32, #tpu.memory_space<vmem>>) attributes {dimension_semantics = [#tpu.dimension_semantics<parallel>], iteration_bounds = array<i64: 1>, scalar_prefetch = 0 : i64, scratch_operands = 0 : i64, tpu.core_type = #tpu.core_type<tc>, window_params = [{transform_indices = @transform_0, window_bounds = array<i64: 1, 8, 512>}, {pipeline_mode = #tpu.pipeline_mode<synchronous>, transform_indices = @transform_1, window_bounds = array<i64: 1, 512>}, {pipeline_mode = #tpu.pipeline_mode<synchronous>, transform_indices = @transform_2, window_bounds = array<i64: 1, 512>}, {pipeline_mode = #tpu.pipeline_mode<synchronous>, transform_indices = @transform_3, window_bounds = array<i64: 8, 72>}, {pipeline_mode = #tpu.pipeline_mode<synchronous>, transform_indices = @transform_4, window_bounds = array<i64: 8, 1>}, {pipeline_mode = #tpu.pipeline_mode<synchronous>, transform_indices = @transform_5, window_bounds = array<i64: 8, 72>}, {pipeline_mode = #tpu.pipeline_mode<synchronous>, transform_indices = @transform_6, window_bounds = array<i64: 8, 1>}, {pipeline_mode = #tpu.pipeline_mode<synchronous>, transform_indices = @transform_7, window_bounds = array<i64: 8, 72>}, {pipeline_mode = #tpu.pipeline_mode<synchronous>, transform_indices = @transform_8, window_bounds = array<i64: 8, 1>}, {pipeline_mode = #tpu.pipeline_mode<synchronous>, transform_indices = @transform_9, window_bounds = array<i64: 8, 72>}, {pipeline_mode = #tpu.pipeline_mode<synchronous>, transform_indices = @transform_10, window_bounds = array<i64: 8, 1>}, {pipeline_mode = #tpu.pipeline_mode<synchronous>, transform_indices = @transform_11, window_bounds = array<i64: 8, 1>}, {pipeline_mode = #tpu.pipeline_mode<synchronous>, transform_indices = @transform_12, window_bounds = array<i64: 1, 1>}, {pipeline_mode = #tpu.pipeline_mode<synchronous>, transform_indices = @transform_13, window_bounds = array<i64: 8, 1>}, {pipeline_mode = #tpu.pipeline_mode<synchronous>, transform_indices = @transform_14, window_bounds = array<i64: 1, 1>}, {transform_indices = @transform_15, window_bounds = array<i64: 1, 1, 512>}, {transform_indices = @transform_16, window_bounds = array<i64: 1, 1, 512>}]} {
    %c0 = arith.constant 0 : index
    %c0_0 = arith.constant 0 : index
    %c0_1 = arith.constant 0 : index
    %0 = vector.load %arg1[%c0, %c0_0, %c0_1] : memref<1x8x512xf32, #tpu.memory_space<vmem>>, vector<1x8x512xf32>
    %1 = vector.shape_cast %0 : vector<1x8x512xf32> to vector<8x512xf32>
    %c511_i32 = arith.constant 511 : i32
    %2 = tpu.dynamic_rotate %1 by %c511_i32 dim 1 : vector<8x512xf32>, i32 -> vector<8x512xf32>
    %c511_i32_2 = arith.constant 511 : i32
    %3 = tpu.dynamic_rotate %2 by %c511_i32_2 dim 1 : vector<8x512xf32>, i32 -> vector<8x512xf32>
    %4 = tpu.concatenate %1, %2, %3 in 0 : vector<8x512xf32>, vector<8x512xf32>, vector<8x512xf32> -> vector<24x512xf32>
    %c496_i32 = arith.constant 496 : i32
    %5 = tpu.dynamic_rotate %4 by %c496_i32 dim 1 : vector<24x512xf32>, i32 -> vector<24x512xf32>
    %c496_i32_3 = arith.constant 496 : i32
    %6 = tpu.dynamic_rotate %5 by %c496_i32_3 dim 1 : vector<24x512xf32>, i32 -> vector<24x512xf32>
    %7 = tpu.concatenate %4, %5, %6 in 0 : vector<24x512xf32>, vector<24x512xf32>, vector<24x512xf32> -> vector<72x512xf32>
    %c0_4 = arith.constant 0 : index
    %c0_5 = arith.constant 0 : index
    %8 = vector.load %arg4[%c0_4, %c0_5] : memref<8x72xbf16, #tpu.memory_space<vmem>>, vector<8x72xbf16>
    %9 = arith.truncf %7 : vector<72x512xf32> to vector<72x512xbf16>
    %cst = arith.constant dense<0.000000e+00> : vector<8x512xf32>
    %10 = tpu.matmul %8, %9, %cst {dimension_numbers = #tpu.dot_dimension_numbers<[1], [0], [0], [1], [0, 0, 1, 1], [], []>} : vector<8x72xbf16>, vector<72x512xbf16>, vector<8x512xf32> -> vector<8x512xf32>
    %c0_6 = arith.constant 0 : index
    %c0_7 = arith.constant 0 : index
    %11 = vector.load %arg5[%c0_6, %c0_7] : memref<8x1xf32, #tpu.memory_space<vmem>>, vector<8x1xf32>
    %12 = vector.broadcast %11 : vector<8x1xf32> to vector<8x512xf32>
    %13 = arith.addf %10, %12 : vector<8x512xf32>
    %cst_8 = arith.constant 0.000000e+00 : f32
    %14 = vector.broadcast %cst_8 : f32 to vector<8x512xf32>
    %15 = arith.maximumf %13, %14 : vector<8x512xf32>
    %c511_i32_9 = arith.constant 511 : i32
    %16 = tpu.dynamic_rotate %15 by %c511_i32_9 dim 1 : vector<8x512xf32>, i32 -> vector<8x512xf32>
    %c511_i32_10 = arith.constant 511 : i32
    %17 = tpu.dynamic_rotate %16 by %c511_i32_10 dim 1 : vector<8x512xf32>, i32 -> vector<8x512xf32>
    %18 = tpu.concatenate %15, %16, %17 in 0 : vector<8x512xf32>, vector<8x512xf32>, vector<8x512xf32> -> vector<24x512xf32>
    %c496_i32_11 = arith.constant 496 : i32
    %19 = tpu.dynamic_rotate %18 by %c496_i32_11 dim 1 : vector<24x512xf32>, i32 -> vector<24x512xf32>
    %c496_i32_12 = arith.constant 496 : i32
    %20 = tpu.dynamic_rotate %19 by %c496_i32_12 dim 1 : vector<24x512xf32>, i32 -> vector<24x512xf32>
    %21 = tpu.concatenate %18, %19, %20 in 0 : vector<24x512xf32>, vector<24x512xf32>, vector<24x512xf32> -> vector<72x512xf32>
    %c0_13 = arith.constant 0 : index
    %c0_14 = arith.constant 0 : index
    %22 = vector.load %arg6[%c0_13, %c0_14] : memref<8x72xbf16, #tpu.memory_space<vmem>>, vector<8x72xbf16>
    %23 = arith.truncf %21 : vector<72x512xf32> to vector<72x512xbf16>
    %cst_15 = arith.constant dense<0.000000e+00> : vector<8x512xf32>
    %24 = tpu.matmul %22, %23, %cst_15 {dimension_numbers = #tpu.dot_dimension_numbers<[1], [0], [0], [1], [0, 0, 1, 1], [], []>} : vector<8x72xbf16>, vector<72x512xbf16>, vector<8x512xf32> -> vector<8x512xf32>
    %c0_16 = arith.constant 0 : index
    %c0_17 = arith.constant 0 : index
    %25 = vector.load %arg7[%c0_16, %c0_17] : memref<8x1xf32, #tpu.memory_space<vmem>>, vector<8x1xf32>
    %26 = vector.broadcast %25 : vector<8x1xf32> to vector<8x512xf32>
    %27 = arith.addf %24, %26 : vector<8x512xf32>
    %cst_18 = arith.constant 0.000000e+00 : f32
    %28 = vector.broadcast %cst_18 : f32 to vector<8x512xf32>
    %29 = arith.maximumf %27, %28 : vector<8x512xf32>
    %c0_19 = arith.constant 0 : index
    %c0_20 = arith.constant 0 : index
    %30 = vector.load %arg2[%c0_19, %c0_20] : memref<1x512xf32, #tpu.memory_space<vmem>>, vector<1x512xf32>
    %c0_21 = arith.constant 0 : index
    %c0_22 = arith.constant 0 : index
    %31 = vector.load %arg12[%c0_21, %c0_22] : memref<8x1xf32, #tpu.memory_space<vmem>>, vector<8x1xf32>
    %32 = vector.broadcast %31 : vector<8x1xf32> to vector<8x512xf32>
    %33 = arith.mulf %29, %32 : vector<8x512xf32>
    %cst_23 = arith.constant dense<0.000000e+00> : vector<512xf32>
    %34 = vector.multi_reduction <add>, %33, %cst_23 [0] : vector<8x512xf32> to vector<512xf32>
    %35 = vector.shape_cast %34 : vector<512xf32> to vector<1x512xf32>
    %c0_24 = arith.constant 0 : index
    %c0_25 = arith.constant 0 : index
    %36 = vector.load %arg13[%c0_24, %c0_25] : memref<1x1xf32, #tpu.memory_space<vmem>>, vector<1x1xf32>
    %37 = vector.broadcast %36 : vector<1x1xf32> to vector<1x512xf32>
    %38 = arith.addf %35, %37 : vector<1x512xf32>
    %39 = arith.negf %38 : vector<1x512xf32>
    %40 = math.exp %39 : vector<1x512xf32>
    %cst_26 = arith.constant 1.000000e+00 : f32
    %41 = vector.broadcast %cst_26 : f32 to vector<1x512xf32>
    %42 = arith.addf %41, %40 : vector<1x512xf32>
    %43 = arith.divf %41, %42 : vector<1x512xf32>
    %44 = arith.mulf %43, %30 : vector<1x512xf32>
    %45 = vector.extract_strided_slice %44 {offsets = [0, 0], sizes = [1, 256], strides = [1, 1]} : vector<1x512xf32> to vector<1x256xf32>
    %cst_27 = arith.constant dense<0.000000e+00> : vector<1xf32>
    %46 = vector.multi_reduction <add>, %45, %cst_27 [1] : vector<1x256xf32> to vector<1xf32>
    %47 = vector.shape_cast %46 : vector<1xf32> to vector<1x1xf32>
    %48 = tpu.reciprocal %47 {approx = true} : vector<1x1xf32> -> vector<1x1xf32>
    %cst_28 = arith.constant 7.200000e+01 : f32
    %49 = vector.broadcast %cst_28 : f32 to vector<1x1xf32>
    %50 = arith.mulf %49, %48 : vector<1x1xf32>
    %51 = vector.broadcast %50 : vector<1x1xf32> to vector<1x256xf32>
    %52 = arith.mulf %45, %51 : vector<1x256xf32>
    %53 = vector.extract_strided_slice %44 {offsets = [0, 256], sizes = [1, 256], strides = [1, 1]} : vector<1x512xf32> to vector<1x256xf32>
    %cst_29 = arith.constant dense<0.000000e+00> : vector<1xf32>
    %54 = vector.multi_reduction <add>, %53, %cst_29 [1] : vector<1x256xf32> to vector<1xf32>
    %55 = vector.shape_cast %54 : vector<1xf32> to vector<1x1xf32>
    %56 = tpu.reciprocal %55 {approx = true} : vector<1x1xf32> -> vector<1x1xf32>
    %cst_30 = arith.constant 7.200000e+01 : f32
    %57 = vector.broadcast %cst_30 : f32 to vector<1x1xf32>
    %58 = arith.mulf %57, %56 : vector<1x1xf32>
    %59 = vector.broadcast %58 : vector<1x1xf32> to vector<1x256xf32>
    %60 = arith.mulf %53, %59 : vector<1x256xf32>
    %61 = tpu.concatenate %52, %60 in 1 : vector<1x256xf32>, vector<1x256xf32> -> vector<1x512xf32>
    %c0_31 = arith.constant 0 : index
    %c0_32 = arith.constant 0 : index
    %c0_33 = arith.constant 0 : index
    %62 = vector.load %arg16[%c0_31, %c0_32, %c0_33] : memref<1x1x512xf32, #tpu.memory_space<vmem>>, vector<1x1x512xf32>
    %63 = vector.shape_cast %62 : vector<1x1x512xf32> to vector<1x512xf32>
    %64 = vector.shape_cast %61 : vector<1x512xf32> to vector<1x1x512xf32>
    tpu.vector_store %arg16[%c0_31, %c0_32, %c0_33], %64 {strides = array<i32>} : memref<1x1x512xf32, #tpu.memory_space<vmem>>, vector<1x1x512xf32>,
    %c511_i32_34 = arith.constant 511 : i32
    %65 = tpu.dynamic_rotate %29 by %c511_i32_34 dim 1 : vector<8x512xf32>, i32 -> vector<8x512xf32>
    %66 = arith.addf %29, %65 : vector<8x512xf32>
    %c496_i32_35 = arith.constant 496 : i32
    %67 = tpu.dynamic_rotate %66 by %c496_i32_35 dim 1 : vector<8x512xf32>, i32 -> vector<8x512xf32>
    %68 = arith.addf %66, %67 : vector<8x512xf32>
    %c510_i32 = arith.constant 510 : i32
    %69 = tpu.dynamic_rotate %68 by %c510_i32 dim 1 : vector<8x512xf32>, i32 -> vector<8x512xf32>
    %c510_i32_36 = arith.constant 510 : i32
    %70 = tpu.dynamic_rotate %69 by %c510_i32_36 dim 1 : vector<8x512xf32>, i32 -> vector<8x512xf32>
    %71 = tpu.concatenate %68, %69, %70 in 0 : vector<8x512xf32>, vector<8x512xf32>, vector<8x512xf32> -> vector<24x512xf32>
    %c480_i32 = arith.constant 480 : i32
    %72 = tpu.dynamic_rotate %71 by %c480_i32 dim 1 : vector<24x512xf32>, i32 -> vector<24x512xf32>
    %c480_i32_37 = arith.constant 480 : i32
    %73 = tpu.dynamic_rotate %72 by %c480_i32_37 dim 1 : vector<24x512xf32>, i32 -> vector<24x512xf32>
    %74 = tpu.concatenate %71, %72, %73 in 0 : vector<24x512xf32>, vector<24x512xf32>, vector<24x512xf32> -> vector<72x512xf32>
    %c0_38 = arith.constant 0 : index
    %c0_39 = arith.constant 0 : index
    %75 = vector.load %arg8[%c0_38, %c0_39] : memref<8x72xbf16, #tpu.memory_space<vmem>>, vector<8x72xbf16>
    %76 = arith.truncf %74 : vector<72x512xf32> to vector<72x512xbf16>
    %cst_40 = arith.constant dense<0.000000e+00> : vector<8x512xf32>
    %77 = tpu.matmul %75, %76, %cst_40 {dimension_numbers = #tpu.dot_dimension_numbers<[1], [0], [0], [1], [0, 0, 1, 1], [], []>} : vector<8x72xbf16>, vector<72x512xbf16>, vector<8x512xf32> -> vector<8x512xf32>
    %c0_41 = arith.constant 0 : index
    %c0_42 = arith.constant 0 : index
    %78 = vector.load %arg9[%c0_41, %c0_42] : memref<8x1xf32, #tpu.memory_space<vmem>>, vector<8x1xf32>
    %79 = vector.broadcast %78 : vector<8x1xf32> to vector<8x512xf32>
    %80 = arith.addf %77, %79 : vector<8x512xf32>
    %cst_43 = arith.constant 0.000000e+00 : f32
    %81 = vector.broadcast %cst_43 : f32 to vector<8x512xf32>
    %82 = arith.maximumf %80, %81 : vector<8x512xf32>
    %c510_i32_44 = arith.constant 510 : i32
    %83 = tpu.dynamic_rotate %82 by %c510_i32_44 dim 1 : vector<8x512xf32>, i32 -> vector<8x512xf32>
    %c510_i32_45 = arith.constant 510 : i32
    %84 = tpu.dynamic_rotate %83 by %c510_i32_45 dim 1 : vector<8x512xf32>, i32 -> vector<8x512xf32>
    %85 = tpu.concatenate %82, %83, %84 in 0 : vector<8x512xf32>, vector<8x512xf32>, vector<8x512xf32> -> vector<24x512xf32>
    %c480_i32_46 = arith.constant 480 : i32
    %86 = tpu.dynamic_rotate %85 by %c480_i32_46 dim 1 : vector<24x512xf32>, i32 -> vector<24x512xf32>
    %c480_i32_47 = arith.constant 480 : i32
    %87 = tpu.dynamic_rotate %86 by %c480_i32_47 dim 1 : vector<24x512xf32>, i32 -> vector<24x512xf32>
    %88 = tpu.concatenate %85, %86, %87 in 0 : vector<24x512xf32>, vector<24x512xf32>, vector<24x512xf32> -> vector<72x512xf32>
    %c0_48 = arith.constant 0 : index
    %c0_49 = arith.constant 0 : index
    %89 = vector.load %arg10[%c0_48, %c0_49] : memref<8x72xbf16, #tpu.memory_space<vmem>>, vector<8x72xbf16>
    %90 = arith.truncf %88 : vector<72x512xf32> to vector<72x512xbf16>
    %cst_50 = arith.constant dense<0.000000e+00> : vector<8x512xf32>
    %91 = tpu.matmul %89, %90, %cst_50 {dimension_numbers = #tpu.dot_dimension_numbers<[1], [0], [0], [1], [0, 0, 1, 1], [], []>} : vector<8x72xbf16>, vector<72x512xbf16>, vector<8x512xf32> -> vector<8x512xf32>
    %c0_51 = arith.constant 0 : index
    %c0_52 = arith.constant 0 : index
    %92 = vector.load %arg11[%c0_51, %c0_52] : memref<8x1xf32, #tpu.memory_space<vmem>>, vector<8x1xf32>
    %93 = vector.broadcast %92 : vector<8x1xf32> to vector<8x512xf32>
    %94 = arith.addf %91, %93 : vector<8x512xf32>
    %cst_53 = arith.constant 0.000000e+00 : f32
    %95 = vector.broadcast %cst_53 : f32 to vector<8x512xf32>
    %96 = arith.maximumf %94, %95 : vector<8x512xf32>
    %c0_54 = arith.constant 0 : index
    %c0_55 = arith.constant 0 : index
    %97 = vector.load %arg3[%c0_54, %c0_55] : memref<1x512xf32, #tpu.memory_space<vmem>>, vector<1x512xf32>
    %c0_56 = arith.constant 0 : index
    %c0_57 = arith.constant 0 : index
    %98 = vector.load %arg14[%c0_56, %c0_57] : memref<8x1xf32, #tpu.memory_space<vmem>>, vector<8x1xf32>
    %99 = vector.broadcast %98 : vector<8x1xf32> to vector<8x512xf32>
    %100 = arith.mulf %96, %99 : vector<8x512xf32>
    %cst_58 = arith.constant dense<0.000000e+00> : vector<512xf32>
    %101 = vector.multi_reduction <add>, %100, %cst_58 [0] : vector<8x512xf32> to vector<512xf32>
    %102 = vector.shape_cast %101 : vector<512xf32> to vector<1x512xf32>
    %c0_59 = arith.constant 0 : index
    %c0_60 = arith.constant 0 : index
    %103 = vector.load %arg15[%c0_59, %c0_60] : memref<1x1xf32, #tpu.memory_space<vmem>>, vector<1x1xf32>
    %104 = vector.broadcast %103 : vector<1x1xf32> to vector<1x512xf32>
    %105 = arith.addf %102, %104 : vector<1x512xf32>
    %106 = arith.negf %105 : vector<1x512xf32>
    %107 = math.exp %106 : vector<1x512xf32>
    %cst_61 = arith.constant 1.000000e+00 : f32
    %108 = vector.broadcast %cst_61 : f32 to vector<1x512xf32>
    %109 = arith.addf %108, %107 : vector<1x512xf32>
    %110 = arith.divf %108, %109 : vector<1x512xf32>
    %111 = arith.mulf %110, %97 : vector<1x512xf32>
    %112 = vector.extract_strided_slice %111 {offsets = [0, 0], sizes = [1, 256], strides = [1, 1]} : vector<1x512xf32> to vector<1x256xf32>
    %cst_62 = arith.constant dense<0.000000e+00> : vector<1xf32>
    %113 = vector.multi_reduction <add>, %112, %cst_62 [1] : vector<1x256xf32> to vector<1xf32>
    %114 = vector.shape_cast %113 : vector<1xf32> to vector<1x1xf32>
    %115 = tpu.reciprocal %114 {approx = true} : vector<1x1xf32> -> vector<1x1xf32>
    %cst_63 = arith.constant 2.000000e+00 : f32
    %116 = vector.broadcast %cst_63 : f32 to vector<1x1xf32>
    %117 = arith.mulf %116, %115 : vector<1x1xf32>
    %118 = vector.broadcast %117 : vector<1x1xf32> to vector<1x256xf32>
    %119 = arith.mulf %112, %118 : vector<1x256xf32>
    %120 = vector.extract_strided_slice %111 {offsets = [0, 256], sizes = [1, 256], strides = [1, 1]} : vector<1x512xf32> to vector<1x256xf32>
    %cst_64 = arith.constant dense<0.000000e+00> : vector<1xf32>
    %121 = vector.multi_reduction <add>, %120, %cst_64 [1] : vector<1x256xf32> to vector<1xf32>
    %122 = vector.shape_cast %121 : vector<1xf32> to vector<1x1xf32>
    %123 = tpu.reciprocal %122 {approx = true} : vector<1x1xf32> -> vector<1x1xf32>
    %cst_65 = arith.constant 2.000000e+00 : f32
    %124 = vector.broadcast %cst_65 : f32 to vector<1x1xf32>
    %125 = arith.mulf %124, %123 : vector<1x1xf32>
    %126 = vector.broadcast %125 : vector<1x1xf32> to vector<1x256xf32>
    %127 = arith.mulf %120, %126 : vector<1x256xf32>
    %128 = tpu.concatenate %119, %127 in 1 : vector<1x256xf32>, vector<1x256xf32> -> vector<1x512xf32>
    %c0_66 = arith.constant 0 : index
    %c0_67 = arith.constant 0 : index
    %c0_68 = arith.constant 0 : index
    %129 = vector.load %arg17[%c0_66, %c0_67, %c0_68] : memref<1x1x512xf32, #tpu.memory_space<vmem>>, vector<1x1x512xf32>
    %130 = vector.shape_cast %129 : vector<1x1x512xf32> to vector<1x512xf32>
    %131 = vector.shape_cast %128 : vector<1x512xf32> to vector<1x1x512xf32>
    tpu.vector_store %arg17[%c0_66, %c0_67, %c0_68], %131 {strides = array<i32>} : memref<1x1x512xf32, #tpu.memory_space<vmem>>, vector<1x1x512xf32>,
    return
  }
  func.func @transform_0(%arg0: i32) -> (i32, i32, i32) {
    %c0_i32 = arith.constant 0 : i32
    %c0_i32_0 = arith.constant 0 : i32
    %c0_i32_1 = arith.constant 0 : i32
    return %arg0, %c0_i32, %c0_i32_0 : i32, i32, i32
  }
  func.func @transform_1(%arg0: i32) -> (i32, i32) {
    %c0_i32 = arith.constant 0 : i32
    %c0_i32_0 = arith.constant 0 : i32
    %c0_i32_1 = arith.constant 0 : i32
    return %c0_i32, %c0_i32_0 : i32, i32
  }
  func.func @transform_2(%arg0: i32) -> (i32, i32) {
    %c0_i32 = arith.constant 0 : i32
    %c0_i32_0 = arith.constant 0 : i32
    %c0_i32_1 = arith.constant 0 : i32
    return %c0_i32, %c0_i32_0 : i32, i32
  }
  func.func @transform_3(%arg0: i32) -> (i32, i32) {
    %c0_i32 = arith.constant 0 : i32
    %c0_i32_0 = arith.constant 0 : i32
    %c0_i32_1 = arith.constant 0 : i32
    return %c0_i32, %c0_i32_0 : i32, i32
  }
  func.func @transform_4(%arg0: i32) -> (i32, i32) {
    %c0_i32 = arith.constant 0 : i32
    %c0_i32_0 = arith.constant 0 : i32
    %c0_i32_1 = arith.constant 0 : i32
    return %c0_i32, %c0_i32_0 : i32, i32
  }
  func.func @transform_5(%arg0: i32) -> (i32, i32) {
    %c0_i32 = arith.constant 0 : i32
    %c0_i32_0 = arith.constant 0 : i32
    %c0_i32_1 = arith.constant 0 : i32
    return %c0_i32, %c0_i32_0 : i32, i32
  }
  func.func @transform_6(%arg0: i32) -> (i32, i32) {
    %c0_i32 = arith.constant 0 : i32
    %c0_i32_0 = arith.constant 0 : i32
    %c0_i32_1 = arith.constant 0 : i32
    return %c0_i32, %c0_i32_0 : i32, i32
  }
  func.func @transform_7(%arg0: i32) -> (i32, i32) {
    %c0_i32 = arith.constant 0 : i32
    %c0_i32_0 = arith.constant 0 : i32
    %c0_i32_1 = arith.constant 0 : i32
    return %c0_i32, %c0_i32_0 : i32, i32
  }
  func.func @transform_8(%arg0: i32) -> (i32, i32) {
    %c0_i32 = arith.constant 0 : i32
    %c0_i32_0 = arith.constant 0 : i32
    %c0_i32_1 = arith.constant 0 : i32
    return %c0_i32, %c0_i32_0 : i32, i32
  }
  func.func @transform_9(%arg0: i32) -> (i32, i32) {
    %c0_i32 = arith.constant 0 : i32
    %c0_i32_0 = arith.constant 0 : i32
    %c0_i32_1 = arith.constant 0 : i32
    return %c0_i32, %c0_i32_0 : i32, i32
  }
  func.func @transform_10(%arg0: i32) -> (i32, i32) {
    %c0_i32 = arith.constant 0 : i32
    %c0_i32_0 = arith.constant 0 : i32
    %c0_i32_1 = arith.constant 0 : i32
    return %c0_i32, %c0_i32_0 : i32, i32
  }
  func.func @transform_11(%arg0: i32) -> (i32, i32) {
    %c0_i32 = arith.constant 0 : i32
    %c0_i32_0 = arith.constant 0 : i32
    %c0_i32_1 = arith.constant 0 : i32
    return %c0_i32, %c0_i32_0 : i32, i32
  }
  func.func @transform_12(%arg0: i32) -> (i32, i32) {
    %c0_i32 = arith.constant 0 : i32
    %c0_i32_0 = arith.constant 0 : i32
    %c0_i32_1 = arith.constant 0 : i32
    return %c0_i32, %c0_i32_0 : i32, i32
  }
  func.func @transform_13(%arg0: i32) -> (i32, i32) {
    %c0_i32 = arith.constant 0 : i32
    %c0_i32_0 = arith.constant 0 : i32
    %c0_i32_1 = arith.constant 0 : i32
    return %c0_i32, %c0_i32_0 : i32, i32
  }
  func.func @transform_14(%arg0: i32) -> (i32, i32) {
    %c0_i32 = arith.constant 0 : i32
    %c0_i32_0 = arith.constant 0 : i32
    %c0_i32_1 = arith.constant 0 : i32
    return %c0_i32, %c0_i32_0 : i32, i32
  }
  func.func @transform_15(%arg0: i32) -> (i32, i32, i32) {
    %c0_i32 = arith.constant 0 : i32
    %c0_i32_0 = arith.constant 0 : i32
    %c0_i32_1 = arith.constant 0 : i32
    return %arg0, %c0_i32, %c0_i32_0 : i32, i32, i32
  }
  func.func @transform_16(%arg0: i32) -> (i32, i32, i32) {
    %c0_i32 = arith.constant 0 : i32
    %c0_i32_0 = arith.constant 0 : i32
    %c0_i32_1 = arith.constant 0 : i32
    return %arg0, %c0_i32, %c0_i32_0 : i32, i32, i32
  }
}

</mosaic_0001>

<llo_original>
// kernel: appearance_model_mtts_forward.1
$region0: #{appearance_model_mtts_forward.1}
  #allocation0 [shape = 'u32[]', space=smem, size = 0x4, offset = 0x4, fixed_abs, tag = 'smem constant byte address 0x4 - core index']
  #allocation1 [shape = 'u32[72,128]{1,0:T(1,128)}', space=vmem, size = 0x9000, scoped, tag = 'internal scratch']
  #allocation2 [shape = 'f32[1,1]{1,0:T(1,128)S(1)}', space=vmem, size = 0x200, scoped, tag = 'scoped memory for appearance_model_mtts_forward.1']
  #allocation3 [shape = 'f32[1,1]{1,0:T(1,128)S(1)}', space=vmem, size = 0x200, scoped, tag = 'scoped memory for appearance_model_mtts_forward.1']
  %s0 = inlined_call_operand.vmem [shape: f32[1,8,512], index: 0, kind: input, shape index: {}]
  %s1 = inlined_call_operand.vmem [shape: f32[1,512], index: 1, kind: input, shape index: {}]
  %s2 = inlined_call_operand.vmem [shape: f32[1,512], index: 2, kind: input, shape index: {}]
  %s3 = inlined_call_operand.vmem [shape: bf16[8,72], index: 3, kind: input, shape index: {}]
  %s4 = inlined_call_operand.vmem [shape: f32[8,1], index: 4, kind: input, shape index: {}]
  %s5 = inlined_call_operand.vmem [shape: bf16[8,72], index: 5, kind: input, shape index: {}]
  %s6 = inlined_call_operand.vmem [shape: f32[8,1], index: 6, kind: input, shape index: {}]
  %s7 = inlined_call_operand.vmem [shape: bf16[8,72], index: 7, kind: input, shape index: {}]
  %s8 = inlined_call_operand.vmem [shape: f32[8,1], index: 8, kind: input, shape index: {}]
  %s9 = inlined_call_operand.vmem [shape: bf16[8,72], index: 9, kind: input, shape index: {}]
  %s10 = inlined_call_operand.vmem [shape: f32[8,1], index: 10, kind: input, shape index: {}]
  %s11 = inlined_call_operand.vmem [shape: f32[8,1], index: 11, kind: input, shape index: {}]
  %s12 = inlined_call_operand.<no memory space> [shape: f32[1,1], index: 12, kind: input, shape index: {}]
  %s13 = inlined_call_operand.vmem [shape: f32[8,1], index: 13, kind: input, shape index: {}]
  %s14 = inlined_call_operand.<no memory space> [shape: f32[1,1], index: 14, kind: input, shape index: {}]
  %s15 = inlined_call_operand.vmem [shape: f32[1,1,512], index: 15, kind: output, shape index: {0}]
  %s16 = inlined_call_operand.vmem [shape: f32[1,1,512], index: 16, kind: output, shape index: {1}]
  %17 = xla_tuple %s15, %s16
  %s18 = sld [smem:[#allocation0]]
  $region78: #{appearance_model_mtts_forward.1} parent=0
    _
  %s20 = ssub.s32 1, %s18
  %s21 = scalar_select 0, %s20, %s18
  %v22 = vstv %s12
  %23 = vst [vmem:[#allocation2] sm:$0x1] %v22
  %v24 = vstv %s14
  %25 = vst [vmem:[#allocation3] sm:$0x1] %v24
  // Predicated region
  $region2: #{appearance_model_mtts_forward.1} parent=0 // pred_check
    _
  $region3: #{appearance_model_mtts_forward.1} parent=0 // pred_check_branch
    %27 = sbr.rel (0) target = $region5
  $region4: #{appearance_model_mtts_forward.1} parent=0 // pred_region
    _
  $region5: #{appearance_model_mtts_forward.1} parent=0 // pred_fallthru
    _
  // Predicated region
  $region6: #{appearance_model_mtts_forward.1} parent=0 // pred_check
    _
  $region7: #{appearance_model_mtts_forward.1} parent=0 // pred_check_branch
    %29 = sbr.rel (0) target = $region9
  $region8: #{appearance_model_mtts_forward.1} parent=0 // pred_region
    _
  $region9: #{appearance_model_mtts_forward.1} parent=0 // pred_fallthru
    _
  // Predicated region
  $region10: #{appearance_model_mtts_forward.1} parent=0 // pred_check
    _
  $region11: #{appearance_model_mtts_forward.1} parent=0 // pred_check_branch
    %31 = sbr.rel (0) target = $region13
  $region12: #{appearance_model_mtts_forward.1} parent=0 // pred_region
    _
  $region13: #{appearance_model_mtts_forward.1} parent=0 // pred_fallthru
    _
  // Predicated region
  $region14: #{appearance_model_mtts_forward.1} parent=0 // pred_check
    _
  $region15: #{appearance_model_mtts_forward.1} parent=0 // pred_check_branch
    %33 = sbr.rel (0) target = $region17
  $region16: #{appearance_model_mtts_forward.1} parent=0 // pred_region
    _
  $region17: #{appearance_model_mtts_forward.1} parent=0 // pred_fallthru
    _
  // Predicated region
  $region18: #{appearance_model_mtts_forward.1} parent=0 // pred_check
    _
  $region19: #{appearance_model_mtts_forward.1} parent=0 // pred_check_branch
    %35 = sbr.rel (0) target = $region21
  $region20: #{appearance_model_mtts_forward.1} parent=0 // pred_region
    _
  $region21: #{appearance_model_mtts_forward.1} parent=0 // pred_fallthru
    _
  // Predicated region
  $region22: #{appearance_model_mtts_forward.1} parent=0 // pred_check
    _
  $region23: #{appearance_model_mtts_forward.1} parent=0 // pred_check_branch
    %37 = sbr.rel (0) target = $region25
  $region24: #{appearance_model_mtts_forward.1} parent=0 // pred_region
    _
  $region25: #{appearance_model_mtts_forward.1} parent=0 // pred_fallthru
    _
  // Predicated region
  $region26: #{appearance_model_mtts_forward.1} parent=0 // pred_check
    _
  $region27: #{appearance_model_mtts_forward.1} parent=0 // pred_check_branch
    %39 = sbr.rel (0) target = $region29
  $region28: #{appearance_model_mtts_forward.1} parent=0 // pred_region
    _
  $region29: #{appearance_model_mtts_forward.1} parent=0 // pred_fallthru
    _
  // Predicated region
  $region30: #{appearance_model_mtts_forward.1} parent=0 // pred_check
    _
  $region31: #{appearance_model_mtts_forward.1} parent=0 // pred_check_branch
    %41 = sbr.rel (0) target = $region33
  $region32: #{appearance_model_mtts_forward.1} parent=0 // pred_region
    _
  $region33: #{appearance_model_mtts_forward.1} parent=0 // pred_fallthru
    _
  // Predicated region
  $region34: #{appearance_model_mtts_forward.1} parent=0 // pred_check
    _
  $region35: #{appearance_model_mtts_forward.1} parent=0 // pred_check_branch
    %43 = sbr.rel (0) target = $region37
  $region36: #{appearance_model_mtts_forward.1} parent=0 // pred_region
    _
  $region37: #{appearance_model_mtts_forward.1} parent=0 // pred_fallthru
    _
  // Predicated region
  $region38: #{appearance_model_mtts_forward.1} parent=0 // pred_check
    _
  $region39: #{appearance_model_mtts_forward.1} parent=0 // pred_check_branch
    %45 = sbr.rel (0) target = $region41
  $region40: #{appearance_model_mtts_forward.1} parent=0 // pred_region
    _
  $region41: #{appearance_model_mtts_forward.1} parent=0 // pred_fallthru
    _
  // Predicated region
  $region42: #{appearance_model_mtts_forward.1} parent=0 // pred_check
    _
  $region43: #{appearance_model_mtts_forward.1} parent=0 // pred_check_branch
    %47 = sbr.rel (0) target = $region45
  $region44: #{appearance_model_mtts_forward.1} parent=0 // pred_region
    _
  $region45: #{appearance_model_mtts_forward.1} parent=0 // pred_fallthru
    _
  // Predicated region
  $region46: #{appearance_model_mtts_forward.1} parent=0 // pred_check
    _
  $region47: #{appearance_model_mtts_forward.1} parent=0 // pred_check_branch
    %49 = sbr.rel (0) target = $region49
  $region48: #{appearance_model_mtts_forward.1} parent=0 // pred_region
    _
  $region49: #{appearance_model_mtts_forward.1} parent=0 // pred_fallthru
    _
  // Predicated region
  $region50: #{appearance_model_mtts_forward.1} parent=0 // pred_check
    _
  $region51: #{appearance_model_mtts_forward.1} parent=0 // pred_check_branch
    %51 = sbr.rel (0) target = $region53
  $region52: #{appearance_model_mtts_forward.1} parent=0 // pred_region
    _
  $region53: #{appearance_model_mtts_forward.1} parent=0 // pred_fallthru
    _
  // Predicated region
  $region54: #{appearance_model_mtts_forward.1} parent=0 // pred_check
    _
  $region55: #{appearance_model_mtts_forward.1} parent=0 // pred_check_branch
    %53 = sbr.rel (0) target = $region57
  $region56: #{appearance_model_mtts_forward.1} parent=0 // pred_region
    _
  $region57: #{appearance_model_mtts_forward.1} parent=0 // pred_fallthru
    _
  // Predicated region
  $region58: #{appearance_model_mtts_forward.1} parent=0 // pred_check
    _
  $region59: #{appearance_model_mtts_forward.1} parent=0 // pred_check_branch
    %55 = sbr.rel (0) target = $region61
  $region60: #{appearance_model_mtts_forward.1} parent=0 // pred_region
    _
  $region61: #{appearance_model_mtts_forward.1} parent=0 // pred_fallthru
    _
  %v57 = vld [vmem:[%s0] sm:$0xff]
  %v58 = vld [vmem:[%s0 + $0x8] sm:$0xff]
  %v59 = vld [vmem:[%s0 + $0x10] sm:$0xff]
  %v60 = vld [vmem:[%s0 + $0x18] sm:$0xff]
  %61 = vrot.lane.b32.xlu0 %v57, 127
  %v62 = vpop.permute.xlu0 %61
  %63 = vrot.lane.b32.xlu0 %v58, 127
  %v64 = vpop.permute.xlu0 %63
  %65 = vrot.lane.b32.xlu0 %v59, 127
  %v66 = vpop.permute.xlu0 %65
  %67 = vrot.lane.b32.xlu0 %v60, 127
  %v68 = vpop.permute.xlu0 %67
  %v69 = vlaneseq
  %v70 = vand.u32 %v69, 127
  %vm71 = vcmp.lt.s32.totalorder %v70, 127
  %v72 = vsel %vm71, %v66, %v68
  %v73 = vsel %vm71, %v64, %v66
  %v74 = vsel %vm71, %v62, %v64
  %v75 = vsel %vm71, %v68, %v62
  %76 = vrot.lane.b32.xlu0 %v74, 127
  %v77 = vpop.permute.xlu0 %76
  %78 = vrot.lane.b32.xlu0 %v73, 127
  %v79 = vpop.permute.xlu0 %78
  %80 = vrot.lane.b32.xlu0 %v72, 127
  %v81 = vpop.permute.xlu0 %80
  %82 = vrot.lane.b32.xlu0 %v75, 127
  %v83 = vpop.permute.xlu0 %82
  %v84 = vsel %vm71, %v81, %v83
  %v85 = vsel %vm71, %v79, %v81
  %v86 = vsel %vm71, %v77, %v79
  %v87 = vsel %vm71, %v83, %v77
  %88 = vrot.lane.b32.xlu0 %v57, 112
  %v89 = vpop.permute.xlu0 %88
  %90 = vrot.lane.b32.xlu0 %v74, 112
  %v91 = vpop.permute.xlu0 %90
  %92 = vrot.lane.b32.xlu0 %v86, 112
  %v93 = vpop.permute.xlu0 %92
  %94 = vrot.lane.b32.xlu0 %v58, 112
  %v95 = vpop.permute.xlu0 %94
  %96 = vrot.lane.b32.xlu0 %v73, 112
  %v97 = vpop.permute.xlu0 %96
  %98 = vrot.lane.b32.xlu0 %v85, 112
  %v99 = vpop.permute.xlu0 %98
  %100 = vrot.lane.b32.xlu0 %v59, 112
  %v101 = vpop.permute.xlu0 %100
  %102 = vrot.lane.b32.xlu0 %v72, 112
  %v103 = vpop.permute.xlu0 %102
  %104 = vrot.lane.b32.xlu0 %v84, 112
  %v105 = vpop.permute.xlu0 %104
  %106 = vrot.lane.b32.xlu0 %v60, 112
  %v107 = vpop.permute.xlu0 %106
  %108 = vrot.lane.b32.xlu0 %v75, 112
  %v109 = vpop.permute.xlu0 %108
  %110 = vrot.lane.b32.xlu0 %v87, 112
  %v111 = vpop.permute.xlu0 %110
  %vm112 = vcmp.lt.s32.totalorder %v70, 112
  %v113 = vsel %vm112, %v101, %v107
  %v114 = vsel %vm112, %v103, %v109
  %v115 = vsel %vm112, %v105, %v111
  %v116 = vsel %vm112, %v95, %v101
  %v117 = vsel %vm112, %v97, %v103
  %v118 = vsel %vm112, %v99, %v105
  %v119 = vsel %vm112, %v89, %v95
  %v120 = vsel %vm112, %v91, %v97
  %v121 = vsel %vm112, %v93, %v99
  %v122 = vsel %vm112, %v107, %v89
  %v123 = vsel %vm112, %v109, %v91
  %v124 = vsel %vm112, %v111, %v93
  %125 = vrot.lane.b32.xlu0 %v119, 112
  %v126 = vpop.permute.xlu0 %125
  %127 = vrot.lane.b32.xlu0 %v120, 112
  %v128 = vpop.permute.xlu0 %127
  %129 = vrot.lane.b32.xlu0 %v121, 112
  %v130 = vpop.permute.xlu0 %129
  %131 = vrot.lane.b32.xlu0 %v116, 112
  %v132 = vpop.permute.xlu0 %131
  %133 = vrot.lane.b32.xlu0 %v117, 112
  %v134 = vpop.permute.xlu0 %133
  %135 = vrot.lane.b32.xlu0 %v118, 112
  %v136 = vpop.permute.xlu0 %135
  %137 = vrot.lane.b32.xlu0 %v113, 112
  %v138 = vpop.permute.xlu0 %137
  %139 = vrot.lane.b32.xlu0 %v114, 112
  %v140 = vpop.permute.xlu0 %139
  %141 = vrot.lane.b32.xlu0 %v115, 112
  %v142 = vpop.permute.xlu0 %141
  %143 = vrot.lane.b32.xlu0 %v122, 112
  %v144 = vpop.permute.xlu0 %143
  %145 = vrot.lane.b32.xlu0 %v123, 112
  %v146 = vpop.permute.xlu0 %145
  %147 = vrot.lane.b32.xlu0 %v124, 112
  %v148 = vpop.permute.xlu0 %147
  %v149 = vsel %vm112, %v138, %v144
  %v150 = vsel %vm112, %v140, %v146
  %v151 = vsel %vm112, %v142, %v148
  %v152 = vsel %vm112, %v132, %v138
  %v153 = vsel %vm112, %v134, %v140
  %v154 = vsel %vm112, %v136, %v142
  %v155 = vsel %vm112, %v126, %v132
  %v156 = vsel %vm112, %v128, %v134
  %v157 = vsel %vm112, %v130, %v136
  %v158 = vsel %vm112, %v144, %v126
  %v159 = vsel %vm112, %v146, %v128
  %v160 = vsel %vm112, %v148, %v130
  %v161 = vld [vmem:[%s3] sm:$0xf]
  %v162 = vpack.c.bf16 %v74, %v57
  %v163 = vpack.c.bf16 %v73, %v58
  %v164 = vpack.c.bf16 %v72, %v59
  %v165 = vpack.c.bf16 %v75, %v60
  %v166 = vpack.c.bf16 %v119, %v86
  %v167 = vpack.c.bf16 %v116, %v85
  %v168 = vpack.c.bf16 %v113, %v84
  %v169 = vpack.c.bf16 %v122, %v87
  %v170 = vpack.c.bf16 %v121, %v120
  %v171 = vpack.c.bf16 %v118, %v117
  %v172 = vpack.c.bf16 %v115, %v114
  %v173 = vpack.c.bf16 %v124, %v123
  %v174 = vpack.c.bf16 %v156, %v155
  %v175 = vpack.c.bf16 %v153, %v152
  %v176 = vpack.c.bf16 %v150, %v149
  %v177 = vpack.c.bf16 %v159, %v158
  %v178 = vpack.c.bf16 %v157, %v157
  %v179 = vpack.c.bf16 %v154, %v154
  %v180 = vpack.c.bf16 %v151, %v151
  %v181 = vpack.c.bf16 %v160, %v160
  %v182 = vld [vmem:[%s4] sm:$0xff]
  %184 = vset.pattern.permute.xlu0 0
  %185 = vperm.xlu0 %184, %v182
  %v186 = vpop.permute.xlu0 %185
  %vm188 = vcmask 588800
  %v190 = vsel %vm188, %v161, 0
  %vm192 = vcmask 1043456
  %v194 = vsel %vm192, %v178, 0
  %v197 = vsel %vm192, %v179, 0
  %v200 = vsel %vm192, %v180, 0
  %v203 = vsel %vm192, %v181, 0
  %205 = vmatpush.bf16.msra.mxu0 0
  %206 = vmatpush.bf16.msra.mxu0 0
  %207 = vmatpush.bf16.msra.mxu0 0
  %208 = vmatpush.bf16.msra.mxu0 %v194
  %209 = vmatpush.bf16.msra.mxu0 %v174
  %210 = vmatpush.bf16.msra.mxu0 %v170
  %211 = vmatpush.bf16.msra.mxu0 %v166
  %212 = vmatpush.bf16.msra.mxu0 %v162
  %213 = vmatmul.bf16.gmra.mxu0 %v190
  %v214 = vpop.f32.mrf.mxu0
  %v215 = vadd.f32 %v186, %v214
  %v216 = vpop.f32.mrf.mxu0
  %217 = vdwg.mxu0
  %218 = vmatpush.bf16.msra.mxu0 0
  %219 = vmatpush.bf16.msra.mxu0 0
  %220 = vmatpush.bf16.msra.mxu0 0
  %221 = vmatpush.bf16.msra.mxu0 %v197
  %222 = vmatpush.bf16.msra.mxu0 %v175
  %223 = vmatpush.bf16.msra.mxu0 %v171
  %224 = vmatpush.bf16.msra.mxu0 %v167
  %225 = vmatpush.bf16.msra.mxu0 %v163
  %226 = vmatmul.bf16.gmra.mxu0 %v190
  %v227 = vpop.f32.mrf.mxu0
  %v228 = vadd.f32 %v186, %v227
  %v229 = vpop.f32.mrf.mxu0
  %230 = vdwg.mxu0
  %231 = vmatpush.bf16.msra.mxu0 0
  %232 = vmatpush.bf16.msra.mxu0 0
  %233 = vmatpush.bf16.msra.mxu0 0
  %234 = vmatpush.bf16.msra.mxu0 %v200
  %235 = vmatpush.bf16.msra.mxu0 %v176
  %236 = vmatpush.bf16.msra.mxu0 %v172
  %237 = vmatpush.bf16.msra.mxu0 %v168
  %238 = vmatpush.bf16.msra.mxu0 %v164
  %239 = vmatmul.bf16.gmra.mxu0 %v190
  %v240 = vpop.f32.mrf.mxu0
  %v241 = vadd.f32 %v186, %v240
  %v242 = vpop.f32.mrf.mxu0
  %243 = vdwg.mxu0
  %244 = vmatpush.bf16.msra.mxu0 0
  %245 = vmatpush.bf16.msra.mxu0 0
  %246 = vmatpush.bf16.msra.mxu0 0
  %247 = vmatpush.bf16.msra.mxu0 %v203
  %248 = vmatpush.bf16.msra.mxu0 %v177
  %249 = vmatpush.bf16.msra.mxu0 %v173
  %250 = vmatpush.bf16.msra.mxu0 %v169
  %251 = vmatpush.bf16.msra.mxu0 %v165
  %252 = vmatmul.bf16.gmra.mxu0 %v190
  %v253 = vpop.f32.mrf.mxu0
  %v254 = vadd.f32 %v186, %v253
  %v255 = vpop.f32.mrf.mxu0
  %256 = vdwg.mxu0
  %v257 = vmax.f32 %v215, 0.0
  %v258 = vmax.f32 %v228, 0.0
  %v259 = vmax.f32 %v241, 0.0
  %v260 = vmax.f32 %v254, 0.0
  %261 = vrot.lane.b32.xlu0 %v257, 127
  %v262 = vpop.permute.xlu0 %261
  %263 = vrot.lane.b32.xlu0 %v258, 127
  %v264 = vpop.permute.xlu0 %263
  %265 = vrot.lane.b32.xlu0 %v259, 127
  %v266 = vpop.permute.xlu0 %265
  %267 = vrot.lane.b32.xlu0 %v260, 127
  %v268 = vpop.permute.xlu0 %267
  %v269 = vsel %vm71, %v266, %v268
  %v270 = vsel %vm71, %v264, %v266
  %v271 = vsel %vm71, %v262, %v264
  %v272 = vsel %vm71, %v268, %v262
  %273 = vrot.lane.b32.xlu0 %v271, 127
  %v274 = vpop.permute.xlu0 %273
  %275 = vrot.lane.b32.xlu0 %v270, 127
  %v276 = vpop.permute.xlu0 %275
  %277 = vrot.lane.b32.xlu0 %v269, 127
  %v278 = vpop.permute.xlu0 %277
  %279 = vrot.lane.b32.xlu0 %v272, 127
  %v280 = vpop.permute.xlu0 %279
  %v281 = vsel %vm71, %v278, %v280
  %v282 = vsel %vm71, %v276, %v278
  %v283 = vsel %vm71, %v274, %v276
  %v284 = vsel %vm71, %v280, %v274
  %285 = vrot.lane.b32.xlu0 %v257, 112
  %v286 = vpop.permute.xlu0 %285
  %287 = vrot.lane.b32.xlu0 %v271, 112
  %v288 = vpop.permute.xlu0 %287
  %289 = vrot.lane.b32.xlu0 %v283, 112
  %v290 = vpop.permute.xlu0 %289
  %291 = vrot.lane.b32.xlu0 %v258, 112
  %v292 = vpop.permute.xlu0 %291
  %293 = vrot.lane.b32.xlu0 %v270, 112
  %v294 = vpop.permute.xlu0 %293
  %295 = vrot.lane.b32.xlu0 %v282, 112
  %v296 = vpop.permute.xlu0 %295
  %297 = vrot.lane.b32.xlu0 %v259, 112
  %v298 = vpop.permute.xlu0 %297
  %299 = vrot.lane.b32.xlu0 %v269, 112
  %v300 = vpop.permute.xlu0 %299
  %301 = vrot.lane.b32.xlu0 %v281, 112
  %v302 = vpop.permute.xlu0 %301
  %303 = vrot.lane.b32.xlu0 %v260, 112
  %v304 = vpop.permute.xlu0 %303
  %305 = vrot.lane.b32.xlu0 %v272, 112
  %v306 = vpop.permute.xlu0 %305
  %307 = vrot.lane.b32.xlu0 %v284, 112
  %v308 = vpop.permute.xlu0 %307
  %v309 = vsel %vm112, %v298, %v304
  %v310 = vsel %vm112, %v300, %v306
  %v311 = vsel %vm112, %v302, %v308
  %v312 = vsel %vm112, %v292, %v298
  %v313 = vsel %vm112, %v294, %v300
  %v314 = vsel %vm112, %v296, %v302
  %v315 = vsel %vm112, %v286, %v292
  %v316 = vsel %vm112, %v288, %v294
  %v317 = vsel %vm112, %v290, %v296
  %v318 = vsel %vm112, %v304, %v286
  %v319 = vsel %vm112, %v306, %v288
  %v320 = vsel %vm112, %v308, %v290
  %321 = vrot.lane.b32.xlu0 %v315, 112
  %v322 = vpop.permute.xlu0 %321
  %323 = vrot.lane.b32.xlu0 %v316, 112
  %v324 = vpop.permute.xlu0 %323
  %325 = vrot.lane.b32.xlu0 %v317, 112
  %v326 = vpop.permute.xlu0 %325
  %327 = vrot.lane.b32.xlu0 %v312, 112
  %v328 = vpop.permute.xlu0 %327
  %329 = vrot.lane.b32.xlu0 %v313, 112
  %v330 = vpop.permute.xlu0 %329
  %331 = vrot.lane.b32.xlu0 %v314, 112
  %v332 = vpop.permute.xlu0 %331
  %333 = vrot.lane.b32.xlu0 %v309, 112
  %v334 = vpop.permute.xlu0 %333
  %335 = vrot.lane.b32.xlu0 %v310, 112
  %v336 = vpop.permute.xlu0 %335
  %337 = vrot.lane.b32.xlu0 %v311, 112
  %v338 = vpop.permute.xlu0 %337
  %339 = vrot.lane.b32.xlu0 %v318, 112
  %v340 = vpop.permute.xlu0 %339
  %341 = vrot.lane.b32.xlu0 %v319, 112
  %v342 = vpop.permute.xlu0 %341
  %343 = vrot.lane.b32.xlu0 %v320, 112
  %v344 = vpop.permute.xlu0 %343
  %v345 = vsel %vm112, %v334, %v340
  %v346 = vsel %vm112, %v336, %v342
  %v347 = vsel %vm112, %v338, %v344
  %v348 = vsel %vm112, %v328, %v334
  %v349 = vsel %vm112, %v330, %v336
  %v350 = vsel %vm112, %v332, %v338
  %v351 = vsel %vm112, %v322, %v328
  %v352 = vsel %vm112, %v324, %v330
  %v353 = vsel %vm112, %v326, %v332
  %v354 = vsel %vm112, %v340, %v322
  %v355 = vsel %vm112, %v342, %v324
  %v356 = vsel %vm112, %v344, %v326
  %v357 = vld [vmem:[%s5] sm:$0xf]
  %v358 = vpack.c.bf16 %v271, %v257
  %v359 = vpack.c.bf16 %v270, %v258
  %v360 = vpack.c.bf16 %v269, %v259
  %v361 = vpack.c.bf16 %v272, %v260
  %v362 = vpack.c.bf16 %v315, %v283
  %v363 = vpack.c.bf16 %v312, %v282
  %v364 = vpack.c.bf16 %v309, %v281
  %v365 = vpack.c.bf16 %v318, %v284
  %v366 = vpack.c.bf16 %v317, %v316
  %v367 = vpack.c.bf16 %v314, %v313
  %v368 = vpack.c.bf16 %v311, %v310
  %v369 = vpack.c.bf16 %v320, %v319
  %v370 = vpack.c.bf16 %v352, %v351
  %v371 = vpack.c.bf16 %v349, %v348
  %v372 = vpack.c.bf16 %v346, %v345
  %v373 = vpack.c.bf16 %v355, %v354
  %v374 = vpack.c.bf16 %v353, %v353
  %v375 = vpack.c.bf16 %v350, %v350
  %v376 = vpack.c.bf16 %v347, %v347
  %v377 = vpack.c.bf16 %v356, %v356
  %v378 = vld [vmem:[%s6] sm:$0xff]
  %380 = vset.pattern.permute.xlu0 0
  %381 = vperm.xlu0 %380, %v378
  %v382 = vpop.permute.xlu0 %381
  %v385 = vsel %vm188, %v357, 0
  %v388 = vsel %vm192, %v374, 0
  %v391 = vsel %vm192, %v375, 0
  %v394 = vsel %vm192, %v376, 0
  %v397 = vsel %vm192, %v377, 0
  %399 = vmatpush.bf16.msra.mxu0 0
  %400 = vmatpush.bf16.msra.mxu0 0
  %401 = vmatpush.bf16.msra.mxu0 0
  %402 = vmatpush.bf16.msra.mxu0 %v388
  %403 = vmatpush.bf16.msra.mxu0 %v370
  %404 = vmatpush.bf16.msra.mxu0 %v366
  %405 = vmatpush.bf16.msra.mxu0 %v362
  %406 = vmatpush.bf16.msra.mxu0 %v358
  %407 = vmatmul.bf16.gmra.mxu0 %v385
  %v408 = vpop.f32.mrf.mxu0
  %v409 = vadd.f32 %v382, %v408
  %v410 = vpop.f32.mrf.mxu0
  %411 = vdwg.mxu0
  %412 = vmatpush.bf16.msra.mxu0 0
  %413 = vmatpush.bf16.msra.mxu0 0
  %414 = vmatpush.bf16.msra.mxu0 0
  %415 = vmatpush.bf16.msra.mxu0 %v391
  %416 = vmatpush.bf16.msra.mxu0 %v371
  %417 = vmatpush.bf16.msra.mxu0 %v367
  %418 = vmatpush.bf16.msra.mxu0 %v363
  %419 = vmatpush.bf16.msra.mxu0 %v359
  %420 = vmatmul.bf16.gmra.mxu0 %v385
  %v421 = vpop.f32.mrf.mxu0
  %v422 = vadd.f32 %v382, %v421
  %v423 = vpop.f32.mrf.mxu0
  %424 = vdwg.mxu0
  %425 = vmatpush.bf16.msra.mxu0 0
  %426 = vmatpush.bf16.msra.mxu0 0
  %427 = vmatpush.bf16.msra.mxu0 0
  %428 = vmatpush.bf16.msra.mxu0 %v394
  %429 = vmatpush.bf16.msra.mxu0 %v372
  %430 = vmatpush.bf16.msra.mxu0 %v368
  %431 = vmatpush.bf16.msra.mxu0 %v364
  %432 = vmatpush.bf16.msra.mxu0 %v360
  %433 = vmatmul.bf16.gmra.mxu0 %v385
  %v434 = vpop.f32.mrf.mxu0
  %v435 = vadd.f32 %v382, %v434
  %v436 = vpop.f32.mrf.mxu0
  %437 = vdwg.mxu0
  %438 = vmatpush.bf16.msra.mxu0 0
  %439 = vmatpush.bf16.msra.mxu0 0
  %440 = vmatpush.bf16.msra.mxu0 0
  %441 = vmatpush.bf16.msra.mxu0 %v397
  %442 = vmatpush.bf16.msra.mxu0 %v373
  %443 = vmatpush.bf16.msra.mxu0 %v369
  %444 = vmatpush.bf16.msra.mxu0 %v365
  %445 = vmatpush.bf16.msra.mxu0 %v361
  %446 = vmatmul.bf16.gmra.mxu0 %v385
  %v447 = vpop.f32.mrf.mxu0
  %v448 = vadd.f32 %v382, %v447
  %v449 = vpop.f32.mrf.mxu0
  %450 = vdwg.mxu0
  %v451 = vmax.f32 %v409, 0.0
  %v452 = vmax.f32 %v422, 0.0
  %v453 = vmax.f32 %v435, 0.0
  %v454 = vmax.f32 %v448, 0.0
  %v455 = vld [vmem:[%s1] sm:$0xf]
  %v456 = vld [vmem:[%s11] sm:$0xff]
  %458 = vset.pattern.permute.xlu0 0
  %459 = vperm.xlu0 %458, %v456
  %v460 = vpop.permute.xlu0 %459
  %v462 = vmul.f32 %v451, %v460
  %v463 = vmul.f32 %v452, %v460
  %v464 = vmul.f32 %v453, %v460
  %v465 = vmul.f32 %v454, %v460
  %v466 = vrot.slane %v462, 4
  %v467 = vadd.f32 %v462, %v466
  %v468 = vrot.slane %v467, 2
  %v469 = vadd.f32 %v467, %v468
  %v470 = vrot.slane %v469, 1
  %v471 = vadd.f32 %v469, %v470
  %v472 = vrot.slane %v463, 4
  %v473 = vadd.f32 %v463, %v472
  %v474 = vrot.slane %v473, 2
  %v475 = vadd.f32 %v473, %v474
  %v476 = vrot.slane %v475, 1
  %v477 = vadd.f32 %v475, %v476
  %v478 = vrot.slane %v464, 4
  %v479 = vadd.f32 %v464, %v478
  %v480 = vrot.slane %v479, 2
  %v481 = vadd.f32 %v479, %v480
  %v482 = vrot.slane %v481, 1
  %v483 = vadd.f32 %v481, %v482
  %v484 = vrot.slane %v465, 4
  %v485 = vadd.f32 %v465, %v484
  %v486 = vrot.slane %v485, 2
  %v487 = vadd.f32 %v485, %v486
  %v488 = vrot.slane %v487, 1
  %v489 = vadd.f32 %v487, %v488
  %v490 = vld [vmem:[#allocation2] sm:$0x1]
  %492 = vset.pattern.permute.xlu0 0
  %493 = vperm.xlu0 %492, %v490
  %v494 = vpop.permute.xlu0 %493
  %v496 = vperm.slane %v494, 0
  %v497 = vadd.f32 %v471, %v496
  %v498 = vadd.f32 %v477, %v496
  %v499 = vadd.f32 %v483, %v496
  %v500 = vadd.f32 %v489, %v496
  %v501 = vxor.u32 %v497, 2147483648
  %v502 = vxor.u32 %v498, 2147483648
  %v503 = vxor.u32 %v499, 2147483648
  %v504 = vxor.u32 %v500, 2147483648
  %v505 = vmul.f32 %v501, 1.442695
  %v506 = vpow.pop %v505
  %v507 = vmul.f32 %v502, 1.442695
  %v508 = vpow.pop %v507
  %v509 = vmul.f32 %v503, 1.442695
  %v510 = vpow.pop %v509
  %v511 = vmul.f32 %v504, 1.442695
  %v512 = vpow.pop %v511
  %v513 = vadd.f32 %v506, 1.0
  %v514 = vadd.f32 %v508, 1.0
  %v515 = vadd.f32 %v510, 1.0
  %v516 = vadd.f32 %v512, 1.0
  %v517 = vrcp.pop %v513
  %v518 = vmul.f32 %v513, %v517
  %v519 = vsub.f32 1.0, %v518
  %v520 = vmul.f32 %v517, %v519
  %v521 = vadd.f32 %v517, %v520
  %vm522 = vweird.f32 %v513
  %vm523 = vweird.f32 %v517
  %vm524 = vmor %vm522, %vm523
  %v525 = vsel %vm524, %v517, %v521
  %v526 = vand.u32 2147483647, %v513
  %vm527 = vcmp.eq.f32.partialorder %v526, 8.507059e+37
  %v528 = vand.u32 %v513, 2147483648
  %v529 = vor.u32 1.1754944e-38, %v528
  %v530 = vsel %vm527, %v529, %v525
  %v531 = vmul.f32 1.0, %v530
  %v532 = vrcp.pop %v514
  %v533 = vmul.f32 %v514, %v532
  %v534 = vsub.f32 1.0, %v533
  %v535 = vmul.f32 %v532, %v534
  %v536 = vadd.f32 %v532, %v535
  %vm537 = vweird.f32 %v514
  %vm538 = vweird.f32 %v532
  %vm539 = vmor %vm537, %vm538
  %v540 = vsel %vm539, %v532, %v536
  %v541 = vand.u32 2147483647, %v514
  %vm542 = vcmp.eq.f32.partialorder %v541, 8.507059e+37
  %v543 = vand.u32 %v514, 2147483648
  %v544 = vor.u32 1.1754944e-38, %v543
  %v545 = vsel %vm542, %v544, %v540
  %v546 = vmul.f32 1.0, %v545
  %v547 = vrcp.pop %v515
  %v548 = vmul.f32 %v515, %v547
  %v549 = vsub.f32 1.0, %v548
  %v550 = vmul.f32 %v547, %v549
  %v551 = vadd.f32 %v547, %v550
  %vm552 = vweird.f32 %v515
  %vm553 = vweird.f32 %v547
  %vm554 = vmor %vm552, %vm553
  %v555 = vsel %vm554, %v547, %v551
  %v556 = vand.u32 2147483647, %v515
  %vm557 = vcmp.eq.f32.partialorder %v556, 8.507059e+37
  %v558 = vand.u32 %v515, 2147483648
  %v559 = vor.u32 1.1754944e-38, %v558
  %v560 = vsel %vm557, %v559, %v555
  %v561 = vmul.f32 1.0, %v560
  %v562 = vrcp.pop %v516
  %v563 = vmul.f32 %v516, %v562
  %v564 = vsub.f32 1.0, %v563
  %v565 = vmul.f32 %v562, %v564
  %v566 = vadd.f32 %v562, %v565
  %vm567 = vweird.f32 %v516
  %vm568 = vweird.f32 %v562
  %vm569 = vmor %vm567, %vm568
  %v570 = vsel %vm569, %v562, %v566
  %v571 = vand.u32 2147483647, %v516
  %vm572 = vcmp.eq.f32.partialorder %v571, 8.507059e+37
  %v573 = vand.u32 %v516, 2147483648
  %v574 = vor.u32 1.1754944e-38, %v573
  %v575 = vsel %vm572, %v574, %v570
  %v576 = vmul.f32 1.0, %v575
  %v578 = vperm.slane %v455, 0
  %v579 = vperm.slane %v455, 1
  %v580 = vperm.slane %v455, 2
  %v581 = vperm.slane %v455, 3
  %v586 = vmul.f32 %v531, %v578
  %v587 = vmul.f32 %v546, %v579
  %v588 = vmul.f32 %v561, %v580
  %v589 = vmul.f32 %v576, %v581
  %vm590 = vcmask 1040384
  %v591 = vsel %vm590, %v586, 0.0
  %v592 = vsel %vm590, %v587, 0.0
  %v593 = vadd.f32 %v591, %v592
  %594 = vadd.xlane.f32.xlu0 %v593
  %v595 = vpop.xlane.xlu0 %594
  %v596 = vrcp.pop %v595
  %v597 = vmul.f32 %v596, 72.0
  %v598 = vmul.f32 %v586, %v597
  %v599 = vmul.f32 %v587, %v597
  %v600 = vsel %vm590, %v588, 0.0
  %v601 = vsel %vm590, %v589, 0.0
  %v602 = vadd.f32 %v600, %v601
  %603 = vadd.xlane.f32.xlu0 %v602
  %v604 = vpop.xlane.xlu0 %603
  %v605 = vrcp.pop %v604
  %v606 = vmul.f32 %v605, 72.0
  %v607 = vmul.f32 %v588, %v606
  %v608 = vmul.f32 %v589, %v606
  %v613 = vrot.slane %v599, 7
  %v614 = vrot.slane %v607, 6
  %v615 = vrot.slane %v608, 5
  %v616 = vsel %vm590, %v598, %v613
  %vm617 = vcmask 1042434
  %v618 = vsel %vm617, %v614, %v615
  %vm619 = vcmask 1041408
  %v620 = vsel %vm619, %v616, %v618
  %v622 = vlaneseq
  %vm623 = vcmp.ge.s32.totalorder %v622, 0
  %vm624 = vcmp.lt.s32.totalorder %v622, 512
  %vm625 = vmand %vm623, %vm624
  %626 = vst.msk [vmem:[%s15] sm:$0xf] %vm625, %v620
  %627 = vrot.lane.b32.xlu0 %v451, 127
  %v628 = vpop.permute.xlu0 %627
  %629 = vrot.lane.b32.xlu0 %v452, 127
  %v630 = vpop.permute.xlu0 %629
  %631 = vrot.lane.b32.xlu0 %v453, 127
  %v632 = vpop.permute.xlu0 %631
  %633 = vrot.lane.b32.xlu0 %v454, 127
  %v634 = vpop.permute.xlu0 %633
  %v635 = vsel %vm71, %v632, %v634
  %v636 = vsel %vm71, %v630, %v632
  %v637 = vsel %vm71, %v628, %v630
  %v638 = vsel %vm71, %v634, %v628
  %v639 = vadd.f32 %v451, %v637
  %v640 = vadd.f32 %v452, %v636
  %v641 = vadd.f32 %v453, %v635
  %v642 = vadd.f32 %v454, %v638
  %643 = vrot.lane.b32.xlu0 %v639, 112
  %v644 = vpop.permute.xlu0 %643
  %645 = vrot.lane.b32.xlu0 %v640, 112
  %v646 = vpop.permute.xlu0 %645
  %647 = vrot.lane.b32.xlu0 %v641, 112
  %v648 = vpop.permute.xlu0 %647
  %649 = vrot.lane.b32.xlu0 %v642, 112
  %v650 = vpop.permute.xlu0 %649
  %v651 = vsel %vm112, %v648, %v650
  %v652 = vsel %vm112, %v646, %v648
  %v653 = vsel %vm112, %v644, %v646
  %v654 = vsel %vm112, %v650, %v644
  %v655 = vadd.f32 %v639, %v653
  %v656 = vadd.f32 %v640, %v652
  %v657 = vadd.f32 %v641, %v651
  %v658 = vadd.f32 %v642, %v654
  %659 = vrot.lane.b32.xlu0 %v655, 126
  %v660 = vpop.permute.xlu0 %659
  %661 = vrot.lane.b32.xlu0 %v656, 126
  %v662 = vpop.permute.xlu0 %661
  %663 = vrot.lane.b32.xlu0 %v657, 126
  %v664 = vpop.permute.xlu0 %663
  %665 = vrot.lane.b32.xlu0 %v658, 126
  %v666 = vpop.permute.xlu0 %665
  %vm667 = vcmp.lt.s32.totalorder %v70, 126
  %v668 = vsel %vm667, %v664, %v666
  %v669 = vsel %vm667, %v662, %v664
  %v670 = vsel %vm667, %v660, %v662
  %v671 = vsel %vm667, %v666, %v660
  %672 = vrot.lane.b32.xlu0 %v670, 126
  %v673 = vpop.permute.xlu0 %672
  %674 = vrot.lane.b32.xlu0 %v669, 126
  %v675 = vpop.permute.xlu0 %674
  %676 = vrot.lane.b32.xlu0 %v668, 126
  %v677 = vpop.permute.xlu0 %676
  %678 = vrot.lane.b32.xlu0 %v671, 126
  %v679 = vpop.permute.xlu0 %678
  %v680 = vsel %vm667, %v677, %v679
  %v681 = vsel %vm667, %v675, %v677
  %v682 = vsel %vm667, %v673, %v675
  %v683 = vsel %vm667, %v679, %v673
  %684 = vrot.lane.b32.xlu0 %v655, 96
  %v685 = vpop.permute.xlu0 %684
  %686 = vrot.lane.b32.xlu0 %v670, 96
  %v687 = vpop.permute.xlu0 %686
  %688 = vrot.lane.b32.xlu0 %v682, 96
  %v689 = vpop.permute.xlu0 %688
  %690 = vrot.lane.b32.xlu0 %v656, 96
  %v691 = vpop.permute.xlu0 %690
  %692 = vrot.lane.b32.xlu0 %v669, 96
  %v693 = vpop.permute.xlu0 %692
  %694 = vrot.lane.b32.xlu0 %v681, 96
  %v695 = vpop.permute.xlu0 %694
  %696 = vrot.lane.b32.xlu0 %v657, 96
  %v697 = vpop.permute.xlu0 %696
  %698 = vrot.lane.b32.xlu0 %v668, 96
  %v699 = vpop.permute.xlu0 %698
  %700 = vrot.lane.b32.xlu0 %v680, 96
  %v701 = vpop.permute.xlu0 %700
  %702 = vrot.lane.b32.xlu0 %v658, 96
  %v703 = vpop.permute.xlu0 %702
  %704 = vrot.lane.b32.xlu0 %v671, 96
  %v705 = vpop.permute.xlu0 %704
  %706 = vrot.lane.b32.xlu0 %v683, 96
  %v707 = vpop.permute.xlu0 %706
  %vm708 = vcmp.lt.s32.totalorder %v70, 96
  %v709 = vsel %vm708, %v697, %v703
  %v710 = vsel %vm708, %v699, %v705
  %v711 = vsel %vm708, %v701, %v707
  %v712 = vsel %vm708, %v691, %v697
  %v713 = vsel %vm708, %v693, %v699
  %v714 = vsel %vm708, %v695, %v701
  %v715 = vsel %vm708, %v685, %v691
  %v716 = vsel %vm708, %v687, %v693
  %v717 = vsel %vm708, %v689, %v695
  %v718 = vsel %vm708, %v703, %v685
  %v719 = vsel %vm708, %v705, %v687
  %v720 = vsel %vm708, %v707, %v689
  %721 = vrot.lane.b32.xlu0 %v715, 96
  %v722 = vpop.permute.xlu0 %721
  %723 = vrot.lane.b32.xlu0 %v716, 96
  %v724 = vpop.permute.xlu0 %723
  %725 = vrot.lane.b32.xlu0 %v717, 96
  %v726 = vpop.permute.xlu0 %725
  %727 = vrot.lane.b32.xlu0 %v712, 96
  %v728 = vpop.permute.xlu0 %727
  %729 = vrot.lane.b32.xlu0 %v713, 96
  %v730 = vpop.permute.xlu0 %729
  %731 = vrot.lane.b32.xlu0 %v714, 96
  %v732 = vpop.permute.xlu0 %731
  %733 = vrot.lane.b32.xlu0 %v709, 96
  %v734 = vpop.permute.xlu0 %733
  %735 = vrot.lane.b32.xlu0 %v710, 96
  %v736 = vpop.permute.xlu0 %735
  %737 = vrot.lane.b32.xlu0 %v711, 96
  %v738 = vpop.permute.xlu0 %737
  %739 = vrot.lane.b32.xlu0 %v718, 96
  %v740 = vpop.permute.xlu0 %739
  %741 = vrot.lane.b32.xlu0 %v719, 96
  %v742 = vpop.permute.xlu0 %741
  %743 = vrot.lane.b32.xlu0 %v720, 96
  %v744 = vpop.permute.xlu0 %743
  %v745 = vsel %vm708, %v734, %v740
  %v746 = vsel %vm708, %v736, %v742
  %v747 = vsel %vm708, %v738, %v744
  %v748 = vsel %vm708, %v728, %v734
  %v749 = vsel %vm708, %v730, %v736
  %v750 = vsel %vm708, %v732, %v738
  %v751 = vsel %vm708, %v722, %v728
  %v752 = vsel %vm708, %v724, %v730
  %v753 = vsel %vm708, %v726, %v732
  %v754 = vsel %vm708, %v740, %v722
  %v755 = vsel %vm708, %v742, %v724
  %v756 = vsel %vm708, %v744, %v726
  %v757 = vld [vmem:[%s7] sm:$0xf]
  %v758 = vpack.c.bf16 %v670, %v655
  %v759 = vpack.c.bf16 %v669, %v656
  %v760 = vpack.c.bf16 %v668, %v657
  %v761 = vpack.c.bf16 %v671, %v658
  %v762 = vpack.c.bf16 %v715, %v682
  %v763 = vpack.c.bf16 %v712, %v681
  %v764 = vpack.c.bf16 %v709, %v680
  %v765 = vpack.c.bf16 %v718, %v683
  %v766 = vpack.c.bf16 %v717, %v716
  %v767 = vpack.c.bf16 %v714, %v713
  %v768 = vpack.c.bf16 %v711, %v710
  %v769 = vpack.c.bf16 %v720, %v719
  %v770 = vpack.c.bf16 %v752, %v751
  %v771 = vpack.c.bf16 %v749, %v748
  %v772 = vpack.c.bf16 %v746, %v745
  %v773 = vpack.c.bf16 %v755, %v754
  %v774 = vpack.c.bf16 %v753, %v753
  %v775 = vpack.c.bf16 %v750, %v750
  %v776 = vpack.c.bf16 %v747, %v747
  %v777 = vpack.c.bf16 %v756, %v756
  %v778 = vld [vmem:[%s8] sm:$0xff]
  %780 = vset.pattern.permute.xlu0 0
  %781 = vperm.xlu0 %780, %v778
  %v782 = vpop.permute.xlu0 %781
  %v785 = vsel %vm188, %v757, 0
  %v788 = vsel %vm192, %v774, 0
  %v791 = vsel %vm192, %v775, 0
  %v794 = vsel %vm192, %v776, 0
  %v797 = vsel %vm192, %v777, 0
  %799 = vmatpush.bf16.msra.mxu0 0
  %800 = vmatpush.bf16.msra.mxu0 0
  %801 = vmatpush.bf16.msra.mxu0 0
  %802 = vmatpush.bf16.msra.mxu0 %v788
  %803 = vmatpush.bf16.msra.mxu0 %v770
  %804 = vmatpush.bf16.msra.mxu0 %v766
  %805 = vmatpush.bf16.msra.mxu0 %v762
  %806 = vmatpush.bf16.msra.mxu0 %v758
  %807 = vmatmul.bf16.gmra.mxu0 %v785
  %v808 = vpop.f32.mrf.mxu0
  %v809 = vadd.f32 %v782, %v808
  %v810 = vpop.f32.mrf.mxu0
  %811 = vdwg.mxu0
  %812 = vmatpush.bf16.msra.mxu0 0
  %813 = vmatpush.bf16.msra.mxu0 0
  %814 = vmatpush.bf16.msra.mxu0 0
  %815 = vmatpush.bf16.msra.mxu0 %v791
  %816 = vmatpush.bf16.msra.mxu0 %v771
  %817 = vmatpush.bf16.msra.mxu0 %v767
  %818 = vmatpush.bf16.msra.mxu0 %v763
  %819 = vmatpush.bf16.msra.mxu0 %v759
  %820 = vmatmul.bf16.gmra.mxu0 %v785
  %v821 = vpop.f32.mrf.mxu0
  %v822 = vadd.f32 %v782, %v821
  %v823 = vpop.f32.mrf.mxu0
  %824 = vdwg.mxu0
  %825 = vmatpush.bf16.msra.mxu0 0
  %826 = vmatpush.bf16.msra.mxu0 0
  %827 = vmatpush.bf16.msra.mxu0 0
  %828 = vmatpush.bf16.msra.mxu0 %v794
  %829 = vmatpush.bf16.msra.mxu0 %v772
  %830 = vmatpush.bf16.msra.mxu0 %v768
  %831 = vmatpush.bf16.msra.mxu0 %v764
  %832 = vmatpush.bf16.msra.mxu0 %v760
  %833 = vmatmul.bf16.gmra.mxu0 %v785
  %v834 = vpop.f32.mrf.mxu0
  %v835 = vadd.f32 %v782, %v834
  %v836 = vpop.f32.mrf.mxu0
  %837 = vdwg.mxu0
  %838 = vmatpush.bf16.msra.mxu0 0
  %839 = vmatpush.bf16.msra.mxu0 0
  %840 = vmatpush.bf16.msra.mxu0 0
  %841 = vmatpush.bf16.msra.mxu0 %v797
  %842 = vmatpush.bf16.msra.mxu0 %v773
  %843 = vmatpush.bf16.msra.mxu0 %v769
  %844 = vmatpush.bf16.msra.mxu0 %v765
  %845 = vmatpush.bf16.msra.mxu0 %v761
  %846 = vmatmul.bf16.gmra.mxu0 %v785
  %v847 = vpop.f32.mrf.mxu0
  %v848 = vadd.f32 %v782, %v847
  %v849 = vpop.f32.mrf.mxu0
  %850 = vdwg.mxu0
  %v851 = vmax.f32 %v809, 0.0
  %v852 = vmax.f32 %v822, 0.0
  %v853 = vmax.f32 %v835, 0.0
  %v854 = vmax.f32 %v848, 0.0
  %855 = vrot.lane.b32.xlu0 %v851, 126
  %v856 = vpop.permute.xlu0 %855
  %857 = vrot.lane.b32.xlu0 %v852, 126
  %v858 = vpop.permute.xlu0 %857
  %859 = vrot.lane.b32.xlu0 %v853, 126
  %v860 = vpop.permute.xlu0 %859
  %861 = vrot.lane.b32.xlu0 %v854, 126
  %v862 = vpop.permute.xlu0 %861
  %v863 = vsel %vm667, %v860, %v862
  %v864 = vsel %vm667, %v858, %v860
  %v865 = vsel %vm667, %v856, %v858
  %v866 = vsel %vm667, %v862, %v856
  %867 = vrot.lane.b32.xlu0 %v865, 126
  %v868 = vpop.permute.xlu0 %867
  %869 = vrot.lane.b32.xlu0 %v864, 126
  %v870 = vpop.permute.xlu0 %869
  %871 = vrot.lane.b32.xlu0 %v863, 126
  %v872 = vpop.permute.xlu0 %871
  %873 = vrot.lane.b32.xlu0 %v866, 126
  %v874 = vpop.permute.xlu0 %873
  %v875 = vsel %vm667, %v872, %v874
  %v876 = vsel %vm667, %v870, %v872
  %v877 = vsel %vm667, %v868, %v870
  %v878 = vsel %vm667, %v874, %v868
  %879 = vrot.lane.b32.xlu0 %v851, 96
  %v880 = vpop.permute.xlu0 %879
  %881 = vrot.lane.b32.xlu0 %v865, 96
  %v882 = vpop.permute.xlu0 %881
  %883 = vrot.lane.b32.xlu0 %v877, 96
  %v884 = vpop.permute.xlu0 %883
  %885 = vrot.lane.b32.xlu0 %v852, 96
  %v886 = vpop.permute.xlu0 %885
  %887 = vrot.lane.b32.xlu0 %v864, 96
  %v888 = vpop.permute.xlu0 %887
  %889 = vrot.lane.b32.xlu0 %v876, 96
  %v890 = vpop.permute.xlu0 %889
  %891 = vrot.lane.b32.xlu0 %v853, 96
  %v892 = vpop.permute.xlu0 %891
  %893 = vrot.lane.b32.xlu0 %v863, 96
  %v894 = vpop.permute.xlu0 %893
  %895 = vrot.lane.b32.xlu0 %v875, 96
  %v896 = vpop.permute.xlu0 %895
  %897 = vrot.lane.b32.xlu0 %v854, 96
  %v898 = vpop.permute.xlu0 %897
  %899 = vrot.lane.b32.xlu0 %v866, 96
  %v900 = vpop.permute.xlu0 %899
  %901 = vrot.lane.b32.xlu0 %v878, 96
  %v902 = vpop.permute.xlu0 %901
  %v903 = vsel %vm708, %v892, %v898
  %v904 = vsel %vm708, %v894, %v900
  %v905 = vsel %vm708, %v896, %v902
  %v906 = vsel %vm708, %v886, %v892
  %v907 = vsel %vm708, %v888, %v894
  %v908 = vsel %vm708, %v890, %v896
  %v909 = vsel %vm708, %v880, %v886
  %v910 = vsel %vm708, %v882, %v888
  %v911 = vsel %vm708, %v884, %v890
  %v912 = vsel %vm708, %v898, %v880
  %v913 = vsel %vm708, %v900, %v882
  %v914 = vsel %vm708, %v902, %v884
  %915 = vrot.lane.b32.xlu0 %v909, 96
  %v916 = vpop.permute.xlu0 %915
  %917 = vrot.lane.b32.xlu0 %v910, 96
  %v918 = vpop.permute.xlu0 %917
  %919 = vrot.lane.b32.xlu0 %v911, 96
  %v920 = vpop.permute.xlu0 %919
  %921 = vrot.lane.b32.xlu0 %v906, 96
  %v922 = vpop.permute.xlu0 %921
  %923 = vrot.lane.b32.xlu0 %v907, 96
  %v924 = vpop.permute.xlu0 %923
  %925 = vrot.lane.b32.xlu0 %v908, 96
  %v926 = vpop.permute.xlu0 %925
  %927 = vrot.lane.b32.xlu0 %v903, 96
  %v928 = vpop.permute.xlu0 %927
  %929 = vrot.lane.b32.xlu0 %v904, 96
  %v930 = vpop.permute.xlu0 %929
  %931 = vrot.lane.b32.xlu0 %v905, 96
  %v932 = vpop.permute.xlu0 %931
  %933 = vrot.lane.b32.xlu0 %v912, 96
  %v934 = vpop.permute.xlu0 %933
  %935 = vrot.lane.b32.xlu0 %v913, 96
  %v936 = vpop.permute.xlu0 %935
  %937 = vrot.lane.b32.xlu0 %v914, 96
  %v938 = vpop.permute.xlu0 %937
  %v939 = vsel %vm708, %v928, %v934
  %v940 = vsel %vm708, %v930, %v936
  %v941 = vsel %vm708, %v932, %v938
  %v942 = vsel %vm708, %v922, %v928
  %v943 = vsel %vm708, %v924, %v930
  %v944 = vsel %vm708, %v926, %v932
  %v945 = vsel %vm708, %v916, %v922
  %v946 = vsel %vm708, %v918, %v924
  %v947 = vsel %vm708, %v920, %v926
  %v948 = vsel %vm708, %v934, %v916
  %v949 = vsel %vm708, %v936, %v918
  %v950 = vsel %vm708, %v938, %v920
  %v951 = vld [vmem:[%s9] sm:$0xf]
  %v952 = vpack.c.bf16 %v865, %v851
  %v953 = vpack.c.bf16 %v864, %v852
  %v954 = vpack.c.bf16 %v863, %v853
  %v955 = vpack.c.bf16 %v866, %v854
  %v956 = vpack.c.bf16 %v909, %v877
  %v957 = vpack.c.bf16 %v906, %v876
  %v958 = vpack.c.bf16 %v903, %v875
  %v959 = vpack.c.bf16 %v912, %v878
  %v960 = vpack.c.bf16 %v911, %v910
  %v961 = vpack.c.bf16 %v908, %v907
  %v962 = vpack.c.bf16 %v905, %v904
  %v963 = vpack.c.bf16 %v914, %v913
  %v964 = vpack.c.bf16 %v946, %v945
  %v965 = vpack.c.bf16 %v943, %v942
  %v966 = vpack.c.bf16 %v940, %v939
  %v967 = vpack.c.bf16 %v949, %v948
  %v968 = vpack.c.bf16 %v947, %v947
  %v969 = vpack.c.bf16 %v944, %v944
  %v970 = vpack.c.bf16 %v941, %v941
  %v971 = vpack.c.bf16 %v950, %v950
  %v972 = vld [vmem:[%s10] sm:$0xff]
  %974 = vset.pattern.permute.xlu0 0
  %975 = vperm.xlu0 %974, %v972
  %v976 = vpop.permute.xlu0 %975
  %v979 = vsel %vm188, %v951, 0
  %v982 = vsel %vm192, %v968, 0
  %v985 = vsel %vm192, %v969, 0
  %v988 = vsel %vm192, %v970, 0
  %v991 = vsel %vm192, %v971, 0
  %993 = vmatpush.bf16.msra.mxu0 0
  %994 = vmatpush.bf16.msra.mxu0 0
  %995 = vmatpush.bf16.msra.mxu0 0
  %996 = vmatpush.bf16.msra.mxu0 %v982
  %997 = vmatpush.bf16.msra.mxu0 %v964
  %998 = vmatpush.bf16.msra.mxu0 %v960
  %999 = vmatpush.bf16.msra.mxu0 %v956
  %1000 = vmatpush.bf16.msra.mxu0 %v952
  %1001 = vmatmul.bf16.gmra.mxu0 %v979
  %v1002 = vpop.f32.mrf.mxu0
  %v1003 = vadd.f32 %v976, %v1002
  %v1004 = vpop.f32.mrf.mxu0
  %1005 = vdwg.mxu0
  %1006 = vmatpush.bf16.msra.mxu0 0
  %1007 = vmatpush.bf16.msra.mxu0 0
  %1008 = vmatpush.bf16.msra.mxu0 0
  %1009 = vmatpush.bf16.msra.mxu0 %v985
  %1010 = vmatpush.bf16.msra.mxu0 %v965
  %1011 = vmatpush.bf16.msra.mxu0 %v961
  %1012 = vmatpush.bf16.msra.mxu0 %v957
  %1013 = vmatpush.bf16.msra.mxu0 %v953
  %1014 = vmatmul.bf16.gmra.mxu0 %v979
  %v1015 = vpop.f32.mrf.mxu0
  %v1016 = vadd.f32 %v976, %v1015
  %v1017 = vpop.f32.mrf.mxu0
  %1018 = vdwg.mxu0
  %1019 = vmatpush.bf16.msra.mxu0 0
  %1020 = vmatpush.bf16.msra.mxu0 0
  %1021 = vmatpush.bf16.msra.mxu0 0
  %1022 = vmatpush.bf16.msra.mxu0 %v988
  %1023 = vmatpush.bf16.msra.mxu0 %v966
  %1024 = vmatpush.bf16.msra.mxu0 %v962
  %1025 = vmatpush.bf16.msra.mxu0 %v958
  %1026 = vmatpush.bf16.msra.mxu0 %v954
  %1027 = vmatmul.bf16.gmra.mxu0 %v979
  %v1028 = vpop.f32.mrf.mxu0
  %v1029 = vadd.f32 %v976, %v1028
  %v1030 = vpop.f32.mrf.mxu0
  %1031 = vdwg.mxu0
  %1032 = vmatpush.bf16.msra.mxu0 0
  %1033 = vmatpush.bf16.msra.mxu0 0
  %1034 = vmatpush.bf16.msra.mxu0 0
  %1035 = vmatpush.bf16.msra.mxu0 %v991
  %1036 = vmatpush.bf16.msra.mxu0 %v967
  %1037 = vmatpush.bf16.msra.mxu0 %v963
  %1038 = vmatpush.bf16.msra.mxu0 %v959
  %1039 = vmatpush.bf16.msra.mxu0 %v955
  %1040 = vmatmul.bf16.gmra.mxu0 %v979
  %v1041 = vpop.f32.mrf.mxu0
  %v1042 = vadd.f32 %v976, %v1041
  %v1043 = vpop.f32.mrf.mxu0
  %1044 = vdwg.mxu0
  %v1045 = vmax.f32 %v1003, 0.0
  %v1046 = vmax.f32 %v1016, 0.0
  %v1047 = vmax.f32 %v1029, 0.0
  %v1048 = vmax.f32 %v1042, 0.0
  %v1049 = vld [vmem:[%s2] sm:$0xf]
  %v1050 = vld [vmem:[%s13] sm:$0xff]
  %1052 = vset.pattern.permute.xlu0 0
  %1053 = vperm.xlu0 %1052, %v1050
  %v1054 = vpop.permute.xlu0 %1053
  %v1056 = vmul.f32 %v1045, %v1054
  %v1057 = vmul.f32 %v1046, %v1054
  %v1058 = vmul.f32 %v1047, %v1054
  %v1059 = vmul.f32 %v1048, %v1054
  %v1060 = vrot.slane %v1056, 4
  %v1061 = vadd.f32 %v1056, %v1060
  %v1062 = vrot.slane %v1061, 2
  %v1063 = vadd.f32 %v1061, %v1062
  %v1064 = vrot.slane %v1063, 1
  %v1065 = vadd.f32 %v1063, %v1064
  %v1066 = vrot.slane %v1057, 4
  %v1067 = vadd.f32 %v1057, %v1066
  %v1068 = vrot.slane %v1067, 2
  %v1069 = vadd.f32 %v1067, %v1068
  %v1070 = vrot.slane %v1069, 1
  %v1071 = vadd.f32 %v1069, %v1070
  %v1072 = vrot.slane %v1058, 4
  %v1073 = vadd.f32 %v1058, %v1072
  %v1074 = vrot.slane %v1073, 2
  %v1075 = vadd.f32 %v1073, %v1074
  %v1076 = vrot.slane %v1075, 1
  %v1077 = vadd.f32 %v1075, %v1076
  %v1078 = vrot.slane %v1059, 4
  %v1079 = vadd.f32 %v1059, %v1078
  %v1080 = vrot.slane %v1079, 2
  %v1081 = vadd.f32 %v1079, %v1080
  %v1082 = vrot.slane %v1081, 1
  %v1083 = vadd.f32 %v1081, %v1082
  %v1084 = vld [vmem:[#allocation3] sm:$0x1]
  %1086 = vset.pattern.permute.xlu0 0
  %1087 = vperm.xlu0 %1086, %v1084
  %v1088 = vpop.permute.xlu0 %1087
  %v1090 = vperm.slane %v1088, 0
  %v1091 = vadd.f32 %v1065, %v1090
  %v1092 = vadd.f32 %v1071, %v1090
  %v1093 = vadd.f32 %v1077, %v1090
  %v1094 = vadd.f32 %v1083, %v1090
  %v1095 = vxor.u32 %v1091, 2147483648
  %v1096 = vxor.u32 %v1092, 2147483648
  %v1097 = vxor.u32 %v1093, 2147483648
  %v1098 = vxor.u32 %v1094, 2147483648
  %v1099 = vmul.f32 %v1095, 1.442695
  %v1100 = vpow.pop %v1099
  %v1101 = vmul.f32 %v1096, 1.442695
  %v1102 = vpow.pop %v1101
  %v1103 = vmul.f32 %v1097, 1.442695
  %v1104 = vpow.pop %v1103
  %v1105 = vmul.f32 %v1098, 1.442695
  %v1106 = vpow.pop %v1105
  %v1107 = vadd.f32 %v1100, 1.0
  %v1108 = vadd.f32 %v1102, 1.0
  %v1109 = vadd.f32 %v1104, 1.0
  %v1110 = vadd.f32 %v1106, 1.0
  %v1111 = vrcp.pop %v1107
  %v1112 = vmul.f32 %v1107, %v1111
  %v1113 = vsub.f32 1.0, %v1112
  %v1114 = vmul.f32 %v1111, %v1113
  %v1115 = vadd.f32 %v1111, %v1114
  %vm1116 = vweird.f32 %v1107
  %vm1117 = vweird.f32 %v1111
  %vm1118 = vmor %vm1116, %vm1117
  %v1119 = vsel %vm1118, %v1111, %v1115
  %v1120 = vand.u32 2147483647, %v1107
  %vm1121 = vcmp.eq.f32.partialorder %v1120, 8.507059e+37
  %v1122 = vand.u32 %v1107, 2147483648
  %v1123 = vor.u32 1.1754944e-38, %v1122
  %v1124 = vsel %vm1121, %v1123, %v1119
  %v1125 = vmul.f32 1.0, %v1124
  %v1126 = vrcp.pop %v1108
  %v1127 = vmul.f32 %v1108, %v1126
  %v1128 = vsub.f32 1.0, %v1127
  %v1129 = vmul.f32 %v1126, %v1128
  %v1130 = vadd.f32 %v1126, %v1129
  %vm1131 = vweird.f32 %v1108
  %vm1132 = vweird.f32 %v1126
  %vm1133 = vmor %vm1131, %vm1132
  %v1134 = vsel %vm1133, %v1126, %v1130
  %v1135 = vand.u32 2147483647, %v1108
  %vm1136 = vcmp.eq.f32.partialorder %v1135, 8.507059e+37
  %v1137 = vand.u32 %v1108, 2147483648
  %v1138 = vor.u32 1.1754944e-38, %v1137
  %v1139 = vsel %vm1136, %v1138, %v1134
  %v1140 = vmul.f32 1.0, %v1139
  %v1141 = vrcp.pop %v1109
  %v1142 = vmul.f32 %v1109, %v1141
  %v1143 = vsub.f32 1.0, %v1142
  %v1144 = vmul.f32 %v1141, %v1143
  %v1145 = vadd.f32 %v1141, %v1144
  %vm1146 = vweird.f32 %v1109
  %vm1147 = vweird.f32 %v1141
  %vm1148 = vmor %vm1146, %vm1147
  %v1149 = vsel %vm1148, %v1141, %v1145
  %v1150 = vand.u32 2147483647, %v1109
  %vm1151 = vcmp.eq.f32.partialorder %v1150, 8.507059e+37
  %v1152 = vand.u32 %v1109, 2147483648
  %v1153 = vor.u32 1.1754944e-38, %v1152
  %v1154 = vsel %vm1151, %v1153, %v1149
  %v1155 = vmul.f32 1.0, %v1154
  %v1156 = vrcp.pop %v1110
  %v1157 = vmul.f32 %v1110, %v1156
  %v1158 = vsub.f32 1.0, %v1157
  %v1159 = vmul.f32 %v1156, %v1158
  %v1160 = vadd.f32 %v1156, %v1159
  %vm1161 = vweird.f32 %v1110
  %vm1162 = vweird.f32 %v1156
  %vm1163 = vmor %vm1161, %vm1162
  %v1164 = vsel %vm1163, %v1156, %v1160
  %v1165 = vand.u32 2147483647, %v1110
  %vm1166 = vcmp.eq.f32.partialorder %v1165, 8.507059e+37
  %v1167 = vand.u32 %v1110, 2147483648
  %v1168 = vor.u32 1.1754944e-38, %v1167
  %v1169 = vsel %vm1166, %v1168, %v1164
  %v1170 = vmul.f32 1.0, %v1169
  %v1172 = vperm.slane %v1049, 0
  %v1173 = vperm.slane %v1049, 1
  %v1174 = vperm.slane %v1049, 2
  %v1175 = vperm.slane %v1049, 3
  %v1180 = vmul.f32 %v1125, %v1172
  %v1181 = vmul.f32 %v1140, %v1173
  %v1182 = vmul.f32 %v1155, %v1174
  %v1183 = vmul.f32 %v1170, %v1175
  %v1184 = vsel %vm590, %v1180, 0.0
  %v1185 = vsel %vm590, %v1181, 0.0
  %v1186 = vadd.f32 %v1184, %v1185
  %1187 = vadd.xlane.f32.xlu0 %v1186
  %v1188 = vpop.xlane.xlu0 %1187
  %v1189 = vrcp.pop %v1188
  %v1190 = vmul.f32 %v1189, 2.0
  %v1191 = vmul.f32 %v1180, %v1190
  %v1192 = vmul.f32 %v1181, %v1190
  %v1193 = vsel %vm590, %v1182, 0.0
  %v1194 = vsel %vm590, %v1183, 0.0
  %v1195 = vadd.f32 %v1193, %v1194
  %1196 = vadd.xlane.f32.xlu0 %v1195
  %v1197 = vpop.xlane.xlu0 %1196
  %v1198 = vrcp.pop %v1197
  %v1199 = vmul.f32 %v1198, 2.0
  %v1200 = vmul.f32 %v1182, %v1199
  %v1201 = vmul.f32 %v1183, %v1199
  %v1206 = vrot.slane %v1192, 7
  %v1207 = vrot.slane %v1200, 6
  %v1208 = vrot.slane %v1201, 5
  %v1209 = vsel %vm590, %v1191, %v1206
  %v1210 = vsel %vm617, %v1207, %v1208
  %v1211 = vsel %vm619, %v1209, %v1210
  %1213 = vst.msk [vmem:[%s16] sm:$0xf] %vm625, %v1211
  // Predicated region
  $region62: #{appearance_model_mtts_forward.1} parent=0 // pred_check
    _
  $region63: #{appearance_model_mtts_forward.1} parent=0 // pred_check_branch
    %1215 = sbr.rel (0) target = $region65
  $region64: #{appearance_model_mtts_forward.1} parent=0 // pred_region
    _
  $region65: #{appearance_model_mtts_forward.1} parent=0 // pred_fallthru
    _
  // Predicated region
  $region66: #{appearance_model_mtts_forward.1} parent=0 // pred_check
    _
  $region67: #{appearance_model_mtts_forward.1} parent=0 // pred_check_branch
    %1217 = sbr.rel (0) target = $region69
  $region68: #{appearance_model_mtts_forward.1} parent=0 // pred_region
    _
  $region69: #{appearance_model_mtts_forward.1} parent=0 // pred_fallthru
    _
  // Predicated region
  $region70: #{appearance_model_mtts_forward.1} parent=0 // pred_check
    _
  $region71: #{appearance_model_mtts_forward.1} parent=0 // pred_check_branch
    %1219 = sbr.rel (0) target = $region73
  $region72: #{appearance_model_mtts_forward.1} parent=0 // pred_region
    _
  $region73: #{appearance_model_mtts_forward.1} parent=0 // pred_fallthru
    _
  // Predicated region
  $region74: #{appearance_model_mtts_forward.1} parent=0 // pred_check
    _
  $region75: #{appearance_model_mtts_forward.1} parent=0 // pred_check_branch
    %1221 = sbr.rel (0) target = $region77
  $region76: #{appearance_model_mtts_forward.1} parent=0 // pred_region
    _
  $region77: #{appearance_model_mtts_forward.1} parent=0 // pred_fallthru
    _

</llo_original>
